<compile_context>
chip_gen: v6e
topology: v6e:2x2x1
jax: 0.10.0
libtpu: 0.0.40
codegen_flags: <defaults>
</compile_context>

<pallas_src>
import jax
import jax.numpy as jnp
from jax.experimental import pallas as pl
from jax.experimental.pallas import tpu as pltpu


# ----------------------------------------------------------------------------
# Hardware / capability probes (cheap, cached, failure-safe).
# ----------------------------------------------------------------------------
_DEFAULT_VMEM_CAP = 64 * 1024 * 1024          # conservative (v7x-sized) default
_PIPELINE_MODE_OK = None


def _tpu_vmem_capacity_bytes():
    try:
        cap = getattr(pltpu.get_tpu_info(), "vmem_capacity_bytes", None)
        if cap:
            return int(cap)
    except Exception:
        pass
    return _DEFAULT_VMEM_CAP


def _pipeline_mode_supported():
    """Probe whether BlockSpec(pipeline_mode=pl.Buffered(n)) is accepted by
    this JAX/Mosaic build (used to single-buffer grid-invariant operands and
    triple-buffer the streamed activation slab).  Falls back cleanly."""
    global _PIPELINE_MODE_OK
    if _PIPELINE_MODE_OK is not None:
        return _PIPELINE_MODE_OK
    try:
        def _probe(x_ref, w_ref, o_ref):
            o_ref[...] = x_ref[...] + w_ref[...]

        fn = pl.pallas_call(
            _probe,
            out_shape=jax.ShapeDtypeStruct((32, 128), jnp.float32),
            grid=(4,),
            in_specs=[pl.BlockSpec((8, 128), lambda i: (i, 0),
                                   pipeline_mode=pl.Buffered(3)),
                      pl.BlockSpec((8, 128), lambda i: (0, 0),
                                   pipeline_mode=pl.Buffered(1))],
            out_specs=pl.BlockSpec((8, 128), lambda i: (i, 0)),
        )
        jax.jit(fn).lower(jax.ShapeDtypeStruct((32, 128), jnp.float32),
                          jax.ShapeDtypeStruct((8, 128), jnp.float32)).compile()
        _PIPELINE_MODE_OK = True
    except Exception:
        _PIPELINE_MODE_OK = False
    return _PIPELINE_MODE_OK


def _spec(shape, index_map, bufs=None):
    if bufs is None:
        return pl.BlockSpec(shape, index_map)
    return pl.BlockSpec(shape, index_map, pipeline_mode=pl.Buffered(bufs))


# ----------------------------------------------------------------------------
# Plain-JAX glue: sampling & grouping (data-dependent gathers).
# ----------------------------------------------------------------------------
def square_distance(src, dst):
    # src [B,N,C], dst [B,M,C] -> [B,N,M]
    dist = -2.0 * jnp.einsum("bnc,bmc->bnm", src, dst)
    dist += jnp.sum(src ** 2, -1)[:, :, None]
    dist += jnp.sum(dst ** 2, -1)[:, None, :]
    return dist


def index_points(points, idx):
    # points [B,N,C], idx [B, ...] -> [B, ..., C]
    return jax.vmap(lambda p, i: p[i])(points, idx)


def farthest_point_sample(xyz, n_samples):
    # TODO(synk): torch reference seeds FPS with torch.randint; we use a
    # deterministic starting index of 0 per batch (rest of FPS is identical).
    B, N, _ = xyz.shape

    def body(carry, _):
        distance, farthest = carry
        centroid = jnp.take_along_axis(xyz, farthest[:, None, None], axis=1)
        dist = jnp.sum((xyz - centroid) ** 2, -1)
        distance = jnp.minimum(distance, dist)
        new_far = jnp.argmax(distance, axis=-1).astype(jnp.int32)
        return (distance, new_far), farthest

    init = (jnp.full((B, N), 1e10, xyz.dtype), jnp.zeros((B,), jnp.int32))
    _, cents = jax.lax.scan(body, init, None, length=n_samples)
    return jnp.transpose(cents)                                   # [B, n_samples]


def query_ball_point(radius, nsample, xyz, new_xyz):
    B, N, _ = xyz.shape
    S = new_xyz.shape[1]
    sqrdists = square_distance(new_xyz, xyz)                      # [B,S,N]
    idx = jnp.broadcast_to(jnp.arange(N, dtype=jnp.int32), (B, S, N))
    idx = jnp.where(sqrdists > radius ** 2, N, idx)
    # nsample smallest indices (== torch's sort()[:, :, :nsample]) via top_k.
    neg_topk, _ = jax.lax.top_k(-idx, nsample)
    group_idx = -neg_topk                                         # ascending
    group_first = jnp.broadcast_to(group_idx[:, :, :1], group_idx.shape)
    group_idx = jnp.where(group_idx == N, group_first, group_idx)
    return group_idx


def sample_and_group(npoint, radius, nsample, xyz, points):
    B, N, C = xyz.shape
    fps_idx = farthest_point_sample(xyz, npoint)                  # [B,S]
    new_xyz = index_points(xyz, fps_idx)                          # [B,S,3]
    idx = query_ball_point(radius, nsample, xyz, new_xyz)         # [B,S,K]
    grouped_xyz = index_points(xyz, idx)                          # [B,S,K,3]
    grouped_xyz_norm = grouped_xyz - new_xyz[:, :, None, :]
    if points is not None:
        grouped_points = index_points(points, idx)                # [B,S,K,D]
        new_points = jnp.concatenate([grouped_xyz_norm, grouped_points], axis=-1)
    else:
        new_points = grouped_xyz_norm
    return new_xyz, new_points


def sample_and_group_all(xyz, points):
    B, N, C = xyz.shape
    new_xyz = jnp.zeros((B, 1, C), xyz.dtype)
    grouped_xyz = xyz[:, None, :, :]
    if points is not None:
        new_points = jnp.concatenate([grouped_xyz, points[:, None, :, :]], axis=-1)
    else:
        new_points = grouped_xyz
    return new_xyz, new_points


# ----------------------------------------------------------------------------
# Tile-size selection with explicit VMEM accounting.
# ----------------------------------------------------------------------------
def _round_up(x, m):
    return ((x + m - 1) // m) * m


def _pick_groups_per_tile(n_groups, k, c_in, c_out, pool, vmem_cap,
                          x_bufs, w_bufs, max_groups_per_tile=None):
    """Pick g (groups per tile).  g divides n_groups (K rows per group stay
    contiguous and never straddle tiles); block shapes respect the (8,128)
    rule; the full tile footprint (streamed activations, f32 temporaries,
    output blocks, weights) stays within a generation-aware VMEM budget."""
    budget = (vmem_cap * 3) // 8                 # ~48 MiB on 128 MiB, ~24 on 64
    tm_cap = 8192 if vmem_cap <= 96 * 1024 * 1024 else 16384

    fixed = w_bufs * c_in * c_out * 2            # bf16 weights
    fixed += 16 * c_out * 4 + 4 * c_in * 2       # bias / scale / shift / stats

    def tile_bytes(g):
        tm = g * k
        byts = x_bufs * tm * c_in * 2            # streamed bf16 activations
        byts += 2 * tm * c_out * 4               # f32 matmul result + temps
        if pool:
            byts += 2 * 2 * g * c_out * 4        # gmax/gmin f32, double-buffered
        else:
            byts += 2 * tm * c_out * 2           # bf16 h output, double-buffered
        return byts + fixed

    def legal(g, strict):
        if max_groups_per_tile is not None and g > max_groups_per_tile:
            return False
        if g == n_groups:                        # full-extent block: always legal
            return True
        if pool and g % 8:                       # pooled output block sublanes
            return False
        tm = g * k
        return (tm % 16 == 0) if strict else (tm % 8 == 0)

    divisors = [g for g in range(1, n_groups + 1) if n_groups % g == 0]
    for strict in (True, False):
        fit = [g for g in divisors if legal(g, strict) and tile_bytes(g) <= budget]
        if fit:
            capped = [g for g in fit if g * k <= tm_cap]
            return max(capped) if capped else min(fit)
    # Nothing fits the budget: fall back to the smallest legal tile (may spill).
    # TODO(synk): split along K (nsample) with partial-max accumulation when even
    # a single group's rows exceed the VMEM budget (huge group_all inputs).
    legal_gs = [g for g in divisors if legal(g, False)]
    return min(legal_gs) if legal_gs else n_groups


# ----------------------------------------------------------------------------
# Pallas kernels: tiled shared-MLP layer (matmul + bias + BN-stat accumulation,
# with the previous layer's BN affine + ReLU fused in, and the K-max-pool fused
# into the last layer).
# ----------------------------------------------------------------------------
def _make_layer_kernel(prenorm, pool, k):
    """Kernel refs: x, [scale, shift], W, b, then outputs
    ([h] or [gmax, gmin]) + (ssum, ssq per-core partials)."""

    def kernel(*refs):
        i = 0
        x_ref = refs[i]; i += 1
        if prenorm:
            scale_ref, shift_ref = refs[i], refs[i + 1]; i += 2
        w_ref, b_ref = refs[i], refs[i + 1]; i += 2
        if pool:
            gmax_ref, gmin_ref, ssum_ref, ssq_ref = refs[i:i + 4]
        else:
            h_ref, ssum_ref, ssq_ref = refs[i:i + 3]

        x = x_ref[...]
        if prenorm:
            # Previous layer's folded BatchNorm affine + ReLU, in bf16 (the
            # result feeds a bf16 matmul, so the extra rounding is benign and
            # it halves VPU work / vreg pressure on bf16-VALU chips).
            x = jnp.maximum(x * scale_ref[...] + shift_ref[...], 0.0)

        # 1x1 Conv2d over channels == matmul (bf16 MXU inputs, f32 accum).
        h = jnp.dot(x, w_ref[...], preferred_element_type=jnp.float32)
        h = h + b_ref[...]

        # Per-channel batch statistics accumulated across the *sequential*
        # inner grid axis into a per-core (outer parallel axis) partial block.
        @pl.when(pl.program_id(1) == 0)
        def _init():
            ssum_ref[...] = jnp.zeros_like(ssum_ref)
            ssq_ref[...] = jnp.zeros_like(ssq_ref)

        ssum_ref[...] = ssum_ref[...] + jnp.sum(h, axis=0, keepdims=True)
        ssq_ref[...] = ssq_ref[...] + jnp.sum(h * h, axis=0, keepdims=True)

        if pool:
            # K rows per group are contiguous and TM is a multiple of K, so
            # groups never straddle tiles.  Emit per-group max AND min of the
            # pre-BN activations; the per-channel (monotone) BN affine + ReLU
            # is applied after pooling by the caller.
            hg = h.reshape(h.shape[0] // k, k, h.shape[1])
            gmax_ref[...] = jnp.max(hg, axis=1)
            gmin_ref[...] = jnp.min(hg, axis=1)
        else:
            h_ref[...] = h.astype(h_ref.dtype)

    return kernel


def _shared_mlp_maxpool(x_flat, params, n_groups, k, vmem_cap, use_buffered,
                        max_groups_per_tile=None):
    """x_flat: [M, Cin_pad] bf16, rows ordered (b, s, k).
    params: list of (W[Cin_pad, Cout_pad] bf16, b, gamma, beta all [1,Cout_pad]).
    Returns max_k(relu(bn(conv(...)))) pooled features [n_groups, Cout_pad_last]."""
    M = x_flat.shape[0]
    n_layers = len(params)
    eps = 1e-5
    vmem_limit = max(int(vmem_cap * 3) // 4, 32 * 1024 * 1024)

    h = x_flat
    scale32 = shift32 = None
    gmax = gmin = None
    for li, (w, b, gamma, beta) in enumerate(params):
        prenorm = li > 0
        pool = li == n_layers - 1
        c_in, c_out = w.shape

        x_bufs = 3 if use_buffered else 2
        w_bufs = 1 if use_buffered else 2
        g = _pick_groups_per_tile(n_groups, k, c_in, c_out, pool, vmem_cap,
                                  x_bufs, w_bufs, max_groups_per_tile)
        tm = g * k
        n_tiles = n_groups // g
        # Leading "parallel" core axis (2-way when it divides evenly) so a
        # 2-TensorCore chip (v7x) shards the tiles; harmless on 1-TC chips.
        ncs = 2 if (n_tiles >= 2 and n_tiles % 2 == 0) else 1
        tpc = n_tiles // ncs
        grid = (ncs, tpc)

        def xmap(c, i, tpc=tpc):
            return (c * tpc + i, 0)

        cmap = lambda c, i: (0, 0)               # noqa: E731 (grid-invariant)
        smap = lambda c, i: (c, 0, 0)            # noqa: E731 (per-core stats)

        const_buf = 1 if use_buffered else None
        x_buf = 3 if (use_buffered and n_tiles >= 3) else None

        in_arrays = [h]
        in_specs = [_spec((tm, c_in), xmap, x_buf)]
        if prenorm:
            in_arrays += [scale32.astype(jnp.bfloat16),
                          shift32.astype(jnp.bfloat16)]
            in_specs += [_spec((1, c_in), cmap, const_buf),
                         _spec((1, c_in), cmap, const_buf)]
        in_arrays += [w, b]
        in_specs += [_spec((c_in, c_out), cmap, const_buf),
                     _spec((1, c_out), cmap, const_buf)]

        # Per-core BN-stat partials; 8 sublane rows so the (8, c_out) trailing
        # block dims satisfy the (8,128) rule (all rows carry the same sums).
        stats_shape = jax.ShapeDtypeStruct((ncs, 8, c_out), jnp.float32)
        stats_spec = pl.BlockSpec((1, 8, c_out), smap)
        if pool:
            out_shape = (jax.ShapeDtypeStruct((n_groups, c_out), jnp.float32),
                         jax.ShapeDtypeStruct((n_groups, c_out), jnp.float32),
                         stats_shape, stats_shape)
            out_specs = (pl.BlockSpec((g, c_out), xmap),
                         pl.BlockSpec((g, c_out), xmap),
                         stats_spec, stats_spec)
            out_bytes = 2 * n_groups * c_out * 4
        else:
            out_shape = (jax.ShapeDtypeStruct((M, c_out), jnp.bfloat16),
                         stats_shape, stats_shape)
            out_specs = (pl.BlockSpec((tm, c_out), xmap), stats_spec, stats_spec)
            out_bytes = M * c_out * 2

        cost = pl.CostEstimate(
            flops=2 * M * c_in * c_out,
            transcendentals=0,
            bytes_accessed=M * c_in * 2 + out_bytes + c_in * c_out * 2)

        outs = pl.pallas_call(
            _make_layer_kernel(prenorm, pool, k),
            out_shape=out_shape,
            grid=grid,
            in_specs=in_specs,
            out_specs=out_specs,
            compiler_params=pltpu.CompilerParams(
                dimension_semantics=("parallel", "arbitrary"),
                vmem_limit_bytes=vmem_limit),
            cost_estimate=cost,
        )(*in_arrays)

        if pool:
            gmax, gmin, ssum, ssq = outs
        else:
            h, ssum, ssq = outs

        # Combine per-core partials, then fold training-mode BatchNorm
        # statistics (biased variance) into a per-channel affine applied in
        # the next pass / after pooling.
        ssum = jnp.sum(ssum[:, 0, :], axis=0, keepdims=True)      # [1, c_out]
        ssq = jnp.sum(ssq[:, 0, :], axis=0, keepdims=True)
        mean = ssum / M
        # TODO(synk): E[h^2]-E[h]^2 in f32 can cancel for very large M with
        # |mean| >> std; a shifted / Welford-style accumulation would be more
        # robust if exact parity with the torch reference is required.
        var = jnp.maximum(ssq / M - mean * mean, 0.0)
        scale32 = gamma * jax.lax.rsqrt(var + eps)
        shift32 = beta - mean * scale32

    # max_k relu(s*h + t) == relu(s * (max_k h if s>=0 else min_k h) + t).
    pooled = scale32 * jnp.where(scale32 >= 0.0, gmax, gmin) + shift32
    return jnp.maximum(pooled, 0.0)                               # [G, Cout_pad]


# ----------------------------------------------------------------------------
# Module
# ----------------------------------------------------------------------------
class PointNetSetAbstraction:
    def __init__(self, npoint, radius, nsample, in_channel, mlp, group_all, key,
                 max_groups_per_tile=None):
        self.npoint = npoint
        self.radius = radius
        self.nsample = nsample
        self.group_all = group_all
        self.in_channel = in_channel
        self.out_channel = mlp[-1]
        self.in_channel_pad = max(8, _round_up(in_channel, 8))
        self.max_groups_per_tile = max_groups_per_tile

        self.vmem_cap = _tpu_vmem_capacity_bytes()
        self.use_buffered = _pipeline_mode_supported()

        # Deterministic synthetic parameters (Conv2d 1x1 weight+bias, BN affine).
        # Intermediate channel widths stay at their (8-aligned) real size (keeps
        # the h slab's HBM traffic minimal); only the final/pooled layer is
        # padded to 128 lanes for a lane-dense pooled store.  Weights are bf16
        # (MXU operands); bias/gamma/beta stay f32.
        self.params = []
        last, last_pad = in_channel, self.in_channel_pad
        n_layers = len(mlp)
        for li, out_c in enumerate(mlp):
            if li == n_layers - 1:
                out_pad = _round_up(out_c, 128)
            else:
                out_pad = max(8, _round_up(out_c, 8))
            key, k1, k2 = jax.random.split(key, 3)
            w = jax.random.normal(k1, (last, out_c), jnp.float32) / jnp.sqrt(
                jnp.float32(last))
            b = 0.1 * jax.random.normal(k2, (1, out_c), jnp.float32)
            w_pad = jnp.zeros((last_pad, out_pad), jnp.float32)
            w_pad = w_pad.at[:last, :out_c].set(w).astype(jnp.bfloat16)
            b_pad = jnp.zeros((1, out_pad), jnp.float32).at[:, :out_c].set(b)
            gamma_pad = jnp.zeros((1, out_pad), jnp.float32).at[:, :out_c].set(1.0)
            beta_pad = jnp.zeros((1, out_pad), jnp.float32)
            self.params.append((w_pad, b_pad, gamma_pad, beta_pad))
            last, last_pad = out_c, out_pad

    def __call__(self, xyz, points):
        # xyz: [B, 3, N], points: [B, D, N] or None   (matches torch forward)
        xyz_t = jnp.transpose(xyz, (0, 2, 1))
        pts_t = None if points is None else jnp.transpose(points, (0, 2, 1))
        if self.group_all:
            new_xyz, new_points = sample_and_group_all(xyz_t, pts_t)
        else:
            new_xyz, new_points = sample_and_group(
                self.npoint, self.radius, self.nsample, xyz_t, pts_t)
        B, S, K, Cin = new_points.shape
        M = B * S * K
        # layout: flatten features-last [B,S,K,C] -> [M, C] with rows ordered
        #         (b,s,k); zero-pad channels to the padded Cin; cast to bf16
        #         (matmul operands are bf16 anyway and it halves DMA bytes).
        x = new_points.reshape(M, Cin).astype(jnp.bfloat16)
        x = jnp.pad(x, ((0, 0), (0, self.in_channel_pad - Cin)))
        pooled = _shared_mlp_maxpool(
            x, self.params, B * S, K, self.vmem_cap, self.use_buffered,
            self.max_groups_per_tile)                            # [B*S, Cout_pad]
        out = pooled[:, :self.out_channel].reshape(B, S, self.out_channel)
        new_points_out = jnp.transpose(out, (0, 2, 1))           # [B, Cout, S]
        new_xyz_out = jnp.transpose(new_xyz, (0, 2, 1))          # [B, 3, S]
        return new_xyz_out, new_points_out


# ----------------------------------------------------------------------------
# Pure-JAX reference for the MLP + BN(train) + ReLU + max-pool part.
# ----------------------------------------------------------------------------
def _reference_mlp_maxpool(new_points, params, out_channel):
    x = new_points.astype(jnp.float32)            # [B,S,K,Cin]
    eps = 1e-5
    for (w, b, gamma, beta) in params:
        cin = x.shape[-1]
        w32 = w.astype(jnp.float32)[:cin]
        h = jnp.einsum("bskc,cd->bskd", x, w32) + b[0]
        mean = jnp.mean(h, axis=(0, 1, 2))
        var = jnp.mean((h - mean) ** 2, axis=(0, 1, 2))
        x = jnp.maximum(gamma[0] * (h - mean) * jax.lax.rsqrt(var + eps)
                        + beta[0], 0.0)
    pooled = jnp.max(x, axis=2)                   # max over K
    return pooled[..., :out_channel]              # [B, S, out_channel]


if __name__ == "__main__":
    key = jax.random.PRNGKey(0)
    kx, kp, kw = jax.random.split(key, 3)
    B, N, D = 2, 16, 3
    xyz = jax.random.normal(kx, (B, 3, N), jnp.float32)
    points = jax.random.normal(kp, (B, D, N), jnp.float32)

    sa = PointNetSetAbstraction(npoint=8, radius=0.8, nsample=8,
                                in_channel=3 + D, mlp=[16, 32],
                                group_all=False, key=kw)

    new_xyz, new_feat = jax.jit(sa.__call__)(xyz, points)
    jax.block_until_ready((new_xyz, new_feat))
    assert new_xyz.shape == (B, 3, 8), new_xyz.shape
    assert new_feat.shape == (B, 32, 8), new_feat.shape
    assert bool(jnp.all(jnp.isfinite(new_feat)))

    # Numerical check against a plain-JAX f32 reference (same sampling glue).
    def ref_fn(xyz_in, points_in):
        xyz_t = jnp.transpose(xyz_in, (0, 2, 1))
        pts_t = jnp.transpose(points_in, (0, 2, 1))
        _, groups = sample_and_group(8, 0.8, 8, xyz_t, pts_t)
        return _reference_mlp_maxpool(groups, sa.params, sa.out_channel)

    ref = jax.jit(ref_fn)(xyz, points)                        # [B, S, Cout]
    got = jnp.transpose(new_feat, (0, 2, 1))
    assert bool(jnp.allclose(got, ref, atol=0.25, rtol=0.1)), (
        "max abs diff %.4f" % float(jnp.max(jnp.abs(got - ref))))

    # Second run with a forced small tile: exercises the multi-tile pipeline,
    # the 2-way "parallel" core axis and the per-core BN partial-stat combine.
    sa_tiled = PointNetSetAbstraction(npoint=8, radius=0.8, nsample=8,
                                      in_channel=3 + D, mlp=[16, 32],
                                      group_all=False, key=kw,
                                      max_groups_per_tile=8)
    _, new_feat2 = jax.jit(sa_tiled.__call__)(xyz, points)
    jax.block_until_ready(new_feat2)
    got2 = jnp.transpose(new_feat2, (0, 2, 1))
    assert bool(jnp.allclose(got2, ref, atol=0.25, rtol=0.1)), (
        "max abs diff %.4f" % float(jnp.max(jnp.abs(got2 - ref))))

    print("KERNEL_OK")
</pallas_src>

<mosaic_0001>
module attributes {stable_mosaic.version = 11 : i64} {
  func.func @kernel(%arg0: i32, %arg1: i32, %arg2: memref<128x8xbf16, #tpu.memory_space<vmem>>, %arg3: memref<8x16xbf16, #tpu.memory_space<vmem>>, %arg4: memref<1x16xf32, #tpu.memory_space<vmem>>, %arg5: memref<128x16xbf16, #tpu.memory_space<vmem>>, %arg6: memref<1x8x16xf32, #tpu.memory_space<vmem>>, %arg7: memref<1x8x16xf32, #tpu.memory_space<vmem>>) attributes {dimension_semantics = [#tpu.dimension_semantics<parallel>, #tpu.dimension_semantics<arbitrary>], iteration_bounds = array<i64: 1, 1>, scalar_prefetch = 0 : i64, scratch_operands = 0 : i64, tpu.core_type = #tpu.core_type<tc>, window_params = [{transform_indices = @transform_0, window_bounds = array<i64: 128, 8>}, {pipeline_mode = #tpu.pipeline_mode<synchronous>, transform_indices = @transform_1, window_bounds = array<i64: 8, 16>}, {pipeline_mode = #tpu.pipeline_mode<synchronous>, transform_indices = @transform_2, window_bounds = array<i64: 1, 16>}, {transform_indices = @transform_3, window_bounds = array<i64: 128, 16>}, {transform_indices = @transform_4, window_bounds = array<i64: 1, 8, 16>}, {transform_indices = @transform_5, window_bounds = array<i64: 1, 8, 16>}]} {
    %c0 = arith.constant 0 : index
    %c0_0 = arith.constant 0 : index
    %0 = vector.load %arg2[%c0, %c0_0] : memref<128x8xbf16, #tpu.memory_space<vmem>>, vector<128x8xbf16>
    %c0_1 = arith.constant 0 : index
    %c0_2 = arith.constant 0 : index
    %1 = vector.load %arg3[%c0_1, %c0_2] : memref<8x16xbf16, #tpu.memory_space<vmem>>, vector<8x16xbf16>
    %cst = arith.constant dense<0.000000e+00> : vector<128x16xf32>
    %2 = tpu.matmul %0, %1, %cst {dimension_numbers = #tpu.dot_dimension_numbers<[1], [0], [0], [1], [0, 0, 1, 1], [], []>} : vector<128x8xbf16>, vector<8x16xbf16>, vector<128x16xf32> -> vector<128x16xf32>
    %c0_3 = arith.constant 0 : index
    %c0_4 = arith.constant 0 : index
    %3 = vector.load %arg4[%c0_3, %c0_4] : memref<1x16xf32, #tpu.memory_space<vmem>>, vector<1x16xf32>
    %4 = vector.broadcast %3 : vector<1x16xf32> to vector<128x16xf32>
    %5 = arith.addf %2, %4 : vector<128x16xf32>
    %c0_i32 = arith.constant 0 : i32
    %6 = arith.cmpi eq, %arg1, %c0_i32 : i32
    %7 = arith.extui %6 : i1 to i32
    %c0_i32_5 = arith.constant 0 : i32
    %8 = arith.cmpi ne, %7, %c0_i32_5 : i32
    scf.if %8 {
      %cst_22 = arith.constant 0.000000e+00 : f32
      %26 = vector.broadcast %cst_22 : f32 to vector<1x8x16xf32>
      %c0_23 = arith.constant 0 : index
      %c0_24 = arith.constant 0 : index
      %c0_25 = arith.constant 0 : index
      %27 = vector.load %arg6[%c0_23, %c0_24, %c0_25] : memref<1x8x16xf32, #tpu.memory_space<vmem>>, vector<1x8x16xf32>
      tpu.vector_store %arg6[%c0_23, %c0_24, %c0_25], %26 {strides = array<i32>} : memref<1x8x16xf32, #tpu.memory_space<vmem>>, vector<1x8x16xf32>,
      %cst_26 = arith.constant 0.000000e+00 : f32
      %28 = vector.broadcast %cst_26 : f32 to vector<1x8x16xf32>
      %c0_27 = arith.constant 0 : index
      %c0_28 = arith.constant 0 : index
      %c0_29 = arith.constant 0 : index
      %29 = vector.load %arg7[%c0_27, %c0_28, %c0_29] : memref<1x8x16xf32, #tpu.memory_space<vmem>>, vector<1x8x16xf32>
      tpu.vector_store %arg7[%c0_27, %c0_28, %c0_29], %28 {strides = array<i32>} : memref<1x8x16xf32, #tpu.memory_space<vmem>>, vector<1x8x16xf32>,
    } else {
    }
    %c0_6 = arith.constant 0 : index
    %c0_7 = arith.constant 0 : index
    %c0_8 = arith.constant 0 : index
    %9 = vector.load %arg6[%c0_6, %c0_7, %c0_8] : memref<1x8x16xf32, #tpu.memory_space<vmem>>, vector<1x8x16xf32>
    %cst_9 = arith.constant dense<0.000000e+00> : vector<16xf32>
    %10 = vector.multi_reduction <add>, %5, %cst_9 [0] : vector<128x16xf32> to vector<16xf32>
    %11 = vector.shape_cast %10 : vector<16xf32> to vector<1x16xf32>
    %12 = vector.shape_cast %11 : vector<1x16xf32> to vector<1x1x16xf32>
    %13 = vector.broadcast %12 : vector<1x1x16xf32> to vector<1x8x16xf32>
    %14 = arith.addf %9, %13 : vector<1x8x16xf32>
    %c0_10 = arith.constant 0 : index
    %c0_11 = arith.constant 0 : index
    %c0_12 = arith.constant 0 : index
    %15 = vector.load %arg6[%c0_10, %c0_11, %c0_12] : memref<1x8x16xf32, #tpu.memory_space<vmem>>, vector<1x8x16xf32>
    tpu.vector_store %arg6[%c0_10, %c0_11, %c0_12], %14 {strides = array<i32>} : memref<1x8x16xf32, #tpu.memory_space<vmem>>, vector<1x8x16xf32>,
    %c0_13 = arith.constant 0 : index
    %c0_14 = arith.constant 0 : index
    %c0_15 = arith.constant 0 : index
    %16 = vector.load %arg7[%c0_13, %c0_14, %c0_15] : memref<1x8x16xf32, #tpu.memory_space<vmem>>, vector<1x8x16xf32>
    %17 = arith.mulf %5, %5 : vector<128x16xf32>
    %cst_16 = arith.constant dense<0.000000e+00> : vector<16xf32>
    %18 = vector.multi_reduction <add>, %17, %cst_16 [0] : vector<128x16xf32> to vector<16xf32>
    %19 = vector.shape_cast %18 : vector<16xf32> to vector<1x16xf32>
    %20 = vector.shape_cast %19 : vector<1x16xf32> to vector<1x1x16xf32>
    %21 = vector.broadcast %20 : vector<1x1x16xf32> to vector<1x8x16xf32>
    %22 = arith.addf %16, %21 : vector<1x8x16xf32>
    %c0_17 = arith.constant 0 : index
    %c0_18 = arith.constant 0 : index
    %c0_19 = arith.constant 0 : index
    %23 = vector.load %arg7[%c0_17, %c0_18, %c0_19] : memref<1x8x16xf32, #tpu.memory_space<vmem>>, vector<1x8x16xf32>
    tpu.vector_store %arg7[%c0_17, %c0_18, %c0_19], %22 {strides = array<i32>} : memref<1x8x16xf32, #tpu.memory_space<vmem>>, vector<1x8x16xf32>,
    %24 = arith.truncf %5 : vector<128x16xf32> to vector<128x16xbf16>
    %c0_20 = arith.constant 0 : index
    %c0_21 = arith.constant 0 : index
    %25 = vector.load %arg5[%c0_20, %c0_21] : memref<128x16xbf16, #tpu.memory_space<vmem>>, vector<128x16xbf16>
    tpu.vector_store %arg5[%c0_20, %c0_21], %24 {strides = array<i32>} : memref<128x16xbf16, #tpu.memory_space<vmem>>, vector<128x16xbf16>,
    return
  }
  func.func @transform_0(%arg0: i32, %arg1: i32) -> (i32, i32) {
    %c1_i32 = arith.constant 1 : i32
    %0 = arith.muli %arg0, %c1_i32 : i32
    %1 = arith.addi %0, %arg1 : i32
    %c0_i32 = arith.constant 0 : i32
    %c0_i32_0 = arith.constant 0 : i32
    return %1, %c0_i32 : i32, i32
  }
  func.func @transform_1(%arg0: i32, %arg1: i32) -> (i32, i32) {
    %c0_i32 = arith.constant 0 : i32
    %c0_i32_0 = arith.constant 0 : i32
    %c0_i32_1 = arith.constant 0 : i32
    return %c0_i32, %c0_i32_0 : i32, i32
  }
  func.func @transform_2(%arg0: i32, %arg1: i32) -> (i32, i32) {
    %c0_i32 = arith.constant 0 : i32
    %c0_i32_0 = arith.constant 0 : i32
    %c0_i32_1 = arith.constant 0 : i32
    return %c0_i32, %c0_i32_0 : i32, i32
  }
  func.func @transform_3(%arg0: i32, %arg1: i32) -> (i32, i32) {
    %c1_i32 = arith.constant 1 : i32
    %0 = arith.muli %arg0, %c1_i32 : i32
    %1 = arith.addi %0, %arg1 : i32
    %c0_i32 = arith.constant 0 : i32
    %c0_i32_0 = arith.constant 0 : i32
    return %1, %c0_i32 : i32, i32
  }
  func.func @transform_4(%arg0: i32, %arg1: i32) -> (i32, i32, i32) {
    %c0_i32 = arith.constant 0 : i32
    %c0_i32_0 = arith.constant 0 : i32
    %c0_i32_1 = arith.constant 0 : i32
    return %arg0, %c0_i32, %c0_i32_0 : i32, i32, i32
  }
  func.func @transform_5(%arg0: i32, %arg1: i32) -> (i32, i32, i32) {
    %c0_i32 = arith.constant 0 : i32
    %c0_i32_0 = arith.constant 0 : i32
    %c0_i32_1 = arith.constant 0 : i32
    return %arg0, %c0_i32, %c0_i32_0 : i32, i32, i32
  }
}

module attributes {stable_mosaic.version = 11 : i64} {
  func.func @kernel(%arg0: i32, %arg1: i32, %arg2: memref<128x16xbf16, #tpu.memory_space<vmem>>, %arg3: memref<1x16xbf16, #tpu.memory_space<vmem>>, %arg4: memref<1x16xbf16, #tpu.memory_space<vmem>>, %arg5: memref<16x128xbf16, #tpu.memory_space<vmem>>, %arg6: memref<1x128xf32, #tpu.memory_space<vmem>>, %arg7: memref<16x128xf32, #tpu.memory_space<vmem>>, %arg8: memref<16x128xf32, #tpu.memory_space<vmem>>, %arg9: memref<1x8x128xf32, #tpu.memory_space<vmem>>, %arg10: memref<1x8x128xf32, #tpu.memory_space<vmem>>) attributes {dimension_semantics = [#tpu.dimension_semantics<parallel>, #tpu.dimension_semantics<arbitrary>], iteration_bounds = array<i64: 1, 1>, scalar_prefetch = 0 : i64, scratch_operands = 0 : i64, tpu.core_type = #tpu.core_type<tc>, window_params = [{transform_indices = @transform_0, window_bounds = array<i64: 128, 16>}, {pipeline_mode = #tpu.pipeline_mode<synchronous>, transform_indices = @transform_1, window_bounds = array<i64: 1, 16>}, {pipeline_mode = #tpu.pipeline_mode<synchronous>, transform_indices = @transform_2, window_bounds = array<i64: 1, 16>}, {pipeline_mode = #tpu.pipeline_mode<synchronous>, transform_indices = @transform_3, window_bounds = array<i64: 16, 128>}, {pipeline_mode = #tpu.pipeline_mode<synchronous>, transform_indices = @transform_4, window_bounds = array<i64: 1, 128>}, {transform_indices = @transform_5, window_bounds = array<i64: 16, 128>}, {transform_indices = @transform_6, window_bounds = array<i64: 16, 128>}, {transform_indices = @transform_7, window_bounds = array<i64: 1, 8, 128>}, {transform_indices = @transform_8, window_bounds = array<i64: 1, 8, 128>}]} {
    %c0 = arith.constant 0 : index
    %c0_0 = arith.constant 0 : index
    %0 = vector.load %arg2[%c0, %c0_0] : memref<128x16xbf16, #tpu.memory_space<vmem>>, vector<128x16xbf16>
    %c0_1 = arith.constant 0 : index
    %c0_2 = arith.constant 0 : index
    %1 = vector.load %arg3[%c0_1, %c0_2] : memref<1x16xbf16, #tpu.memory_space<vmem>>, vector<1x16xbf16>
    %2 = vector.broadcast %1 : vector<1x16xbf16> to vector<128x16xbf16>
    %3 = arith.mulf %0, %2 : vector<128x16xbf16>
    %c0_3 = arith.constant 0 : index
    %c0_4 = arith.constant 0 : index
    %4 = vector.load %arg4[%c0_3, %c0_4] : memref<1x16xbf16, #tpu.memory_space<vmem>>, vector<1x16xbf16>
    %5 = vector.broadcast %4 : vector<1x16xbf16> to vector<128x16xbf16>
    %6 = arith.addf %3, %5 : vector<128x16xbf16>
    %cst = arith.constant 0.000000e+00 : bf16
    %7 = vector.broadcast %cst : bf16 to vector<128x16xbf16>
    %8 = arith.maximumf %6, %7 : vector<128x16xbf16>
    %c0_5 = arith.constant 0 : index
    %c0_6 = arith.constant 0 : index
    %9 = vector.load %arg5[%c0_5, %c0_6] : memref<16x128xbf16, #tpu.memory_space<vmem>>, vector<16x128xbf16>
    %cst_7 = arith.constant dense<0.000000e+00> : vector<128x128xf32>
    %10 = tpu.matmul %8, %9, %cst_7 {dimension_numbers = #tpu.dot_dimension_numbers<[1], [0], [0], [1], [0, 0, 1, 1], [], []>} : vector<128x16xbf16>, vector<16x128xbf16>, vector<128x128xf32> -> vector<128x128xf32>
    %c0_8 = arith.constant 0 : index
    %c0_9 = arith.constant 0 : index
    %11 = vector.load %arg6[%c0_8, %c0_9] : memref<1x128xf32, #tpu.memory_space<vmem>>, vector<1x128xf32>
    %12 = vector.broadcast %11 : vector<1x128xf32> to vector<128x128xf32>
    %13 = arith.addf %10, %12 : vector<128x128xf32>
    %c0_i32 = arith.constant 0 : i32
    %14 = arith.cmpi eq, %arg1, %c0_i32 : i32
    %15 = arith.extui %14 : i1 to i32
    %c0_i32_10 = arith.constant 0 : i32
    %16 = arith.cmpi ne, %15, %c0_i32_10 : i32
    scf.if %16 {
      %cst_31 = arith.constant 0.000000e+00 : f32
      %37 = vector.broadcast %cst_31 : f32 to vector<1x8x128xf32>
      %c0_32 = arith.constant 0 : index
      %c0_33 = arith.constant 0 : index
      %c0_34 = arith.constant 0 : index
      %38 = vector.load %arg9[%c0_32, %c0_33, %c0_34] : memref<1x8x128xf32, #tpu.memory_space<vmem>>, vector<1x8x128xf32>
      tpu.vector_store %arg9[%c0_32, %c0_33, %c0_34], %37 {strides = array<i32>} : memref<1x8x128xf32, #tpu.memory_space<vmem>>, vector<1x8x128xf32>,
      %cst_35 = arith.constant 0.000000e+00 : f32
      %39 = vector.broadcast %cst_35 : f32 to vector<1x8x128xf32>
      %c0_36 = arith.constant 0 : index
      %c0_37 = arith.constant 0 : index
      %c0_38 = arith.constant 0 : index
      %40 = vector.load %arg10[%c0_36, %c0_37, %c0_38] : memref<1x8x128xf32, #tpu.memory_space<vmem>>, vector<1x8x128xf32>
      tpu.vector_store %arg10[%c0_36, %c0_37, %c0_38], %39 {strides = array<i32>} : memref<1x8x128xf32, #tpu.memory_space<vmem>>, vector<1x8x128xf32>,
    } else {
    }
    %c0_11 = arith.constant 0 : index
    %c0_12 = arith.constant 0 : index
    %c0_13 = arith.constant 0 : index
    %17 = vector.load %arg9[%c0_11, %c0_12, %c0_13] : memref<1x8x128xf32, #tpu.memory_space<vmem>>, vector<1x8x128xf32>
    %cst_14 = arith.constant dense<0.000000e+00> : vector<128xf32>
    %18 = vector.multi_reduction <add>, %13, %cst_14 [0] : vector<128x128xf32> to vector<128xf32>
    %19 = vector.shape_cast %18 : vector<128xf32> to vector<1x128xf32>
    %20 = vector.shape_cast %19 : vector<1x128xf32> to vector<1x1x128xf32>
    %21 = vector.broadcast %20 : vector<1x1x128xf32> to vector<1x8x128xf32>
    %22 = arith.addf %17, %21 : vector<1x8x128xf32>
    %c0_15 = arith.constant 0 : index
    %c0_16 = arith.constant 0 : index
    %c0_17 = arith.constant 0 : index
    %23 = vector.load %arg9[%c0_15, %c0_16, %c0_17] : memref<1x8x128xf32, #tpu.memory_space<vmem>>, vector<1x8x128xf32>
    tpu.vector_store %arg9[%c0_15, %c0_16, %c0_17], %22 {strides = array<i32>} : memref<1x8x128xf32, #tpu.memory_space<vmem>>, vector<1x8x128xf32>,
    %c0_18 = arith.constant 0 : index
    %c0_19 = arith.constant 0 : index
    %c0_20 = arith.constant 0 : index
    %24 = vector.load %arg10[%c0_18, %c0_19, %c0_20] : memref<1x8x128xf32, #tpu.memory_space<vmem>>, vector<1x8x128xf32>
    %25 = arith.mulf %13, %13 : vector<128x128xf32>
    %cst_21 = arith.constant dense<0.000000e+00> : vector<128xf32>
    %26 = vector.multi_reduction <add>, %25, %cst_21 [0] : vector<128x128xf32> to vector<128xf32>
    %27 = vector.shape_cast %26 : vector<128xf32> to vector<1x128xf32>
    %28 = vector.shape_cast %27 : vector<1x128xf32> to vector<1x1x128xf32>
    %29 = vector.broadcast %28 : vector<1x1x128xf32> to vector<1x8x128xf32>
    %30 = arith.addf %24, %29 : vector<1x8x128xf32>
    %c0_22 = arith.constant 0 : index
    %c0_23 = arith.constant 0 : index
    %c0_24 = arith.constant 0 : index
    %31 = vector.load %arg10[%c0_22, %c0_23, %c0_24] : memref<1x8x128xf32, #tpu.memory_space<vmem>>, vector<1x8x128xf32>
    tpu.vector_store %arg10[%c0_22, %c0_23, %c0_24], %30 {strides = array<i32>} : memref<1x8x128xf32, #tpu.memory_space<vmem>>, vector<1x8x128xf32>,
    %32 = vector.shape_cast %13 : vector<128x128xf32> to vector<16x8x128xf32>
    %cst_25 = arith.constant dense<0xFF800000> : vector<16x128xf32>
    %33 = vector.multi_reduction <maximumf>, %32, %cst_25 [1] : vector<16x8x128xf32> to vector<16x128xf32>
    %c0_26 = arith.constant 0 : index
    %c0_27 = arith.constant 0 : index
    %34 = vector.load %arg7[%c0_26, %c0_27] : memref<16x128xf32, #tpu.memory_space<vmem>>, vector<16x128xf32>
    tpu.vector_store %arg7[%c0_26, %c0_27], %33 {strides = array<i32>} : memref<16x128xf32, #tpu.memory_space<vmem>>, vector<16x128xf32>,
    %cst_28 = arith.constant dense<0x7F800000> : vector<16x128xf32>
    %35 = vector.multi_reduction <minimumf>, %32, %cst_28 [1] : vector<16x8x128xf32> to vector<16x128xf32>
    %c0_29 = arith.constant 0 : index
    %c0_30 = arith.constant 0 : index
    %36 = vector.load %arg8[%c0_29, %c0_30] : memref<16x128xf32, #tpu.memory_space<vmem>>, vector<16x128xf32>
    tpu.vector_store %arg8[%c0_29, %c0_30], %35 {strides = array<i32>} : memref<16x128xf32, #tpu.memory_space<vmem>>, vector<16x128xf32>,
    return
  }
  func.func @transform_0(%arg0: i32, %arg1: i32) -> (i32, i32) {
    %c1_i32 = arith.constant 1 : i32
    %0 = arith.muli %arg0, %c1_i32 : i32
    %1 = arith.addi %0, %arg1 : i32
    %c0_i32 = arith.constant 0 : i32
    %c0_i32_0 = arith.constant 0 : i32
    return %1, %c0_i32 : i32, i32
  }
  func.func @transform_1(%arg0: i32, %arg1: i32) -> (i32, i32) {
    %c0_i32 = arith.constant 0 : i32
    %c0_i32_0 = arith.constant 0 : i32
    %c0_i32_1 = arith.constant 0 : i32
    return %c0_i32, %c0_i32_0 : i32, i32
  }
  func.func @transform_2(%arg0: i32, %arg1: i32) -> (i32, i32) {
    %c0_i32 = arith.constant 0 : i32
    %c0_i32_0 = arith.constant 0 : i32
    %c0_i32_1 = arith.constant 0 : i32
    return %c0_i32, %c0_i32_0 : i32, i32
  }
  func.func @transform_3(%arg0: i32, %arg1: i32) -> (i32, i32) {
    %c0_i32 = arith.constant 0 : i32
    %c0_i32_0 = arith.constant 0 : i32
    %c0_i32_1 = arith.constant 0 : i32
    return %c0_i32, %c0_i32_0 : i32, i32
  }
  func.func @transform_4(%arg0: i32, %arg1: i32) -> (i32, i32) {
    %c0_i32 = arith.constant 0 : i32
    %c0_i32_0 = arith.constant 0 : i32
    %c0_i32_1 = arith.constant 0 : i32
    return %c0_i32, %c0_i32_0 : i32, i32
  }
  func.func @transform_5(%arg0: i32, %arg1: i32) -> (i32, i32) {
    %c1_i32 = arith.constant 1 : i32
    %0 = arith.muli %arg0, %c1_i32 : i32
    %1 = arith.addi %0, %arg1 : i32
    %c0_i32 = arith.constant 0 : i32
    %c0_i32_0 = arith.constant 0 : i32
    return %1, %c0_i32 : i32, i32
  }
  func.func @transform_6(%arg0: i32, %arg1: i32) -> (i32, i32) {
    %c1_i32 = arith.constant 1 : i32
    %0 = arith.muli %arg0, %c1_i32 : i32
    %1 = arith.addi %0, %arg1 : i32
    %c0_i32 = arith.constant 0 : i32
    %c0_i32_0 = arith.constant 0 : i32
    return %1, %c0_i32 : i32, i32
  }
  func.func @transform_7(%arg0: i32, %arg1: i32) -> (i32, i32, i32) {
    %c0_i32 = arith.constant 0 : i32
    %c0_i32_0 = arith.constant 0 : i32
    %c0_i32_1 = arith.constant 0 : i32
    return %arg0, %c0_i32, %c0_i32_0 : i32, i32, i32
  }
  func.func @transform_8(%arg0: i32, %arg1: i32) -> (i32, i32, i32) {
    %c0_i32 = arith.constant 0 : i32
    %c0_i32_0 = arith.constant 0 : i32
    %c0_i32_1 = arith.constant 0 : i32
    return %arg0, %c0_i32, %c0_i32_0 : i32, i32, i32
  }
}

</mosaic_0001>

<llo_original>
// kernel: custom-call.10
$region0: #{custom-call.10}
  %s0 = inlined_call_operand.vmem [shape: s32[8,2], index: 0, kind: output, shape index: {}]

// kernel: custom-call.8
$region0: #{custom-call.8}
  %s0 = inlined_call_operand.vmem [shape: f32[2,16], index: 0, kind: output, shape index: {}]

// kernel: a_call__.2
$region0: #{a_call__.2}
  #allocation0 [shape = 'u32[]', space=smem, size = 0x4, offset = 0x4, fixed_abs, tag = 'smem constant byte address 0x4 - core index']
  #allocation1 [shape = 'u32[144,128]{1,0:T(1,128)}', space=vmem, size = 0x12000, scoped, tag = 'internal scratch']
  %s0 = inlined_call_operand.vmem [shape: bf16[128,8], index: 0, kind: input, shape index: {}]
  %s1 = inlined_call_operand.vmem [shape: bf16[8,16], index: 1, kind: input, shape index: {}]
  %s2 = inlined_call_operand.vmem [shape: f32[1,16], index: 2, kind: input, shape index: {}]
  %s3 = inlined_call_operand.vmem [shape: bf16[128,16], index: 3, kind: output, shape index: {0}]
  %s4 = inlined_call_operand.vmem [shape: f32[1,8,16], index: 4, kind: output, shape index: {1}]
  %s5 = inlined_call_operand.vmem [shape: f32[1,8,16], index: 5, kind: output, shape index: {2}]
  %6 = xla_tuple %s3, %s4, %s5
  %s7 = sld [smem:[#allocation0]]
  $region42: #{a_call__.2} parent=0
    _
  %s9 = ssub.s32 1, %s7
  %s10 = scalar_select 0, %s9, %s7
  // Predicated region
  $region2: #{a_call__.2} parent=0 // pred_check
    _
  $region3: #{a_call__.2} parent=0 // pred_check_branch
    %12 = sbr.rel (0) target = $region5
  $region4: #{a_call__.2} parent=0 // pred_region
    %s13 = sadd.s32 0, 0
    %s14 = smul.u32 16, %s13
    %p15 = scmp.lt.s32.totalorder %s14, 15
    %s16 = scalar_select %p15, %s14, 15
    %s17 = smul.addr %s16, 4
    %s18 = scalar_lea.vmem %s0, %s17
    %s19 = sadd.s32 0, 0
    %s20 = smul.u32 16, %s19
  $region5: #{a_call__.2} parent=0 // pred_fallthru
    _
  // Predicated region
  $region6: #{a_call__.2} parent=0 // pred_check
    _
  $region7: #{a_call__.2} parent=0 // pred_check_branch
    %22 = sbr.rel (0) target = $region9
  $region8: #{a_call__.2} parent=0 // pred_region
    _
  $region9: #{a_call__.2} parent=0 // pred_fallthru
    _
  // Predicated region
  $region10: #{a_call__.2} parent=0 // pred_check
    _
  $region11: #{a_call__.2} parent=0 // pred_check_branch
    %24 = sbr.rel (0) target = $region13
  $region12: #{a_call__.2} parent=0 // pred_region
    _
  $region13: #{a_call__.2} parent=0 // pred_fallthru
    _
  %s25 = sadd.s32 0, 0
  %s26 = smul.u32 16, %s25
  %p27 = scmp.lt.s32.totalorder %s26, 15
  %s28 = scalar_select %p27, %s26, 15
  %s29 = smul.addr %s28, 4
  %s30 = scalar_lea.vmem %s0, %s29
  %s31 = sadd.s32 0, 0
  %s32 = smul.u32 16, %s31
  %p33 = scmp.lt.s32.totalorder %s32, 15
  %s34 = scalar_select %p33, %s32, 15
  %s35 = smul.addr %s34, 4
  %s36 = scalar_lea.vmem %s3, %s35
  %s37 = sadd.s32 0, 0
  %s38 = smul.u32 16, %s37
  %p39 = scmp.lt.s32.totalorder %s38, 15
  %s40 = scalar_select %p39, %s38, 15
  %s41 = smul.addr %s40, 4
  %s42 = scalar_lea.vmem %s0, %s41
  %s43 = sadd.s32 0, 0
  %s44 = smul.u32 16, %s43
  %s45 = sadd.s32 0, 0
  %s46 = smul.u32 16, %s45
  %p47 = scmp.lt.s32.totalorder %s46, 15
  %s48 = scalar_select %p47, %s46, 15
  %s49 = smul.addr %s48, 4
  %s50 = scalar_lea.vmem %s3, %s49
  %s51 = sadd.s32 0, 0
  %s52 = smul.u32 16, %s51
  %v54 = vld [vmem:[%s42] sm:$0xf]
  %v55 = vld [vmem:[%s42 + $0x4] sm:$0xf]
  %v56 = vld [vmem:[%s42 + $0x8] sm:$0xf]
  %v57 = vld [vmem:[%s42 + $0xc] sm:$0xf]
  %v58 = vld [vmem:[%s42 + $0x10] sm:$0xf]
  %v59 = vld [vmem:[%s42 + $0x14] sm:$0xf]
  %v60 = vld [vmem:[%s42 + $0x18] sm:$0xf]
  %v61 = vld [vmem:[%s42 + $0x1c] sm:$0xf]
  %v62 = vld [vmem:[%s42 + $0x20] sm:$0xf]
  %v63 = vld [vmem:[%s42 + $0x24] sm:$0xf]
  %v64 = vld [vmem:[%s42 + $0x28] sm:$0xf]
  %v65 = vld [vmem:[%s42 + $0x2c] sm:$0xf]
  %v66 = vld [vmem:[%s42 + $0x30] sm:$0xf]
  %v67 = vld [vmem:[%s42 + $0x34] sm:$0xf]
  %v68 = vld [vmem:[%s42 + $0x38] sm:$0xf]
  %v69 = vld [vmem:[%s42 + $0x3c] sm:$0xf]
  %v70 = vld [vmem:[%s1] sm:$0xf]
  %v71 = vld [vmem:[%s2] sm:$0x1]
  %v73 = vlaneseq
  %v74 = vshrl.u32 %v73, 7
  %v75 = vsub.s32 0, %v74
  %v76 = vrot.slane %v71, %v75
  %v94 = vunpack.c.l.b16 %v54
  %v95 = vunpack.c.l.b16 %v55
  %v96 = vunpack.c.l.b16 %v56
  %v97 = vunpack.c.l.b16 %v57
  %v98 = vunpack.c.l.b16 %v58
  %v99 = vunpack.c.l.b16 %v59
  %v100 = vunpack.c.l.b16 %v60
  %v101 = vunpack.c.l.b16 %v61
  %v102 = vunpack.c.l.b16 %v62
  %v103 = vunpack.c.l.b16 %v63
  %v104 = vunpack.c.l.b16 %v64
  %v105 = vunpack.c.l.b16 %v65
  %v106 = vunpack.c.l.b16 %v66
  %v107 = vunpack.c.l.b16 %v67
  %v108 = vunpack.c.l.b16 %v68
  %v109 = vunpack.c.l.b16 %v69
  %v110 = vpack.c.b16 %v95, %v94
  %v111 = vpack.c.b16 %v97, %v96
  %v112 = vpack.c.b16 %v99, %v98
  %v113 = vpack.c.b16 %v101, %v100
  %v114 = vpack.c.b16 %v103, %v102
  %v115 = vpack.c.b16 %v105, %v104
  %v116 = vpack.c.b16 %v107, %v106
  %v117 = vpack.c.b16 %v109, %v108
  %vm118 = vcmask 64512
  %v120 = vsel %vm118, %v110, 0
  %v123 = vsel %vm118, %v111, 0
  %v126 = vsel %vm118, %v112, 0
  %v129 = vsel %vm118, %v113, 0
  %v132 = vsel %vm118, %v114, 0
  %v135 = vsel %vm118, %v115, 0
  %v138 = vsel %vm118, %v116, 0
  %v141 = vsel %vm118, %v117, 0
  %vm143 = vcmask 1043456
  %v145 = vsel %vm143, %v70, 0
  %147 = vmatprep.subr.bf16.mxu0 0
  %148 = vmatpush1.bf16.msra.mxu0 0
  %149 = vmatprep.subr.bf16.mxu0 0
  %150 = vmatpush1.bf16.msra.mxu0 0
  %151 = vmatprep.subr.bf16.mxu0 0
  %152 = vmatpush1.bf16.msra.mxu0 0
  %153 = vmatprep.subr.bf16.mxu0 0
  %154 = vmatpush1.bf16.msra.mxu0 0
  %155 = vmatprep.subr.bf16.mxu0 0
  %156 = vmatpush1.bf16.msra.mxu0 0
  %157 = vmatprep.subr.bf16.mxu0 0
  %158 = vmatpush1.bf16.msra.mxu0 0
  %159 = vmatprep.subr.bf16.mxu0 0
  %160 = vmatpush1.bf16.msra.mxu0 0
  %161 = vmatprep.subr.bf16.mxu0 0
  %162 = vmatpush1.bf16.msra.mxu0 %v145
  %163 = vmatprep.subr.bf16.mxu0 0
  %164 = vmatpush2.bf16.msra.mxu0 0
  %165 = vmatprep.subr.bf16.mxu0 0
  %166 = vmatpush2.bf16.msra.mxu0 0
  %167 = vmatprep.subr.bf16.mxu0 0
  %168 = vmatpush2.bf16.msra.mxu0 0
  %169 = vmatprep.subr.bf16.mxu0 0
  %170 = vmatpush2.bf16.msra.mxu0 0
  %171 = vmatprep.subr.bf16.mxu0 0
  %172 = vmatpush2.bf16.msra.mxu0 0
  %173 = vmatprep.subr.bf16.mxu0 0
  %174 = vmatpush2.bf16.msra.mxu0 0
  %175 = vmatprep.subr.bf16.mxu0 0
  %176 = vmatpush2.bf16.msra.mxu0 0
  %177 = vmatprep.subr.bf16.mxu0 0
  %178 = vmatpush2.bf16.msra.mxu0 0
  %179 = vmatprep.mubr.bf16.mxu0 0
  %180 = vmatmul.mubr.bf16.gmra.mxu0 %v120
  %v181 = vpop.f32.mrf.mxu0
  %v182 = vadd.f32 %v76, %v181
  %v183 = vpop.f32.mrf.mxu0
  %v184 = vpop.f32.mrf.mxu0
  %v185 = vadd.f32 %v76, %v184
  %v186 = vpop.f32.mrf.mxu0
  %187 = vmatprep.mubr.bf16.mxu0 0
  %188 = vmatmul.mubr.bf16.gmra.mxu0 %v123
  %v189 = vpop.f32.mrf.mxu0
  %v190 = vadd.f32 %v76, %v189
  %v191 = vpop.f32.mrf.mxu0
  %v192 = vpop.f32.mrf.mxu0
  %v193 = vadd.f32 %v76, %v192
  %v194 = vpop.f32.mrf.mxu0
  %195 = vmatprep.mubr.bf16.mxu0 0
  %196 = vmatmul.mubr.bf16.gmra.mxu0 %v126
  %v197 = vpop.f32.mrf.mxu0
  %v198 = vadd.f32 %v76, %v197
  %v199 = vpop.f32.mrf.mxu0
  %v200 = vpop.f32.mrf.mxu0
  %v201 = vadd.f32 %v76, %v200
  %v202 = vpop.f32.mrf.mxu0
  %203 = vmatprep.mubr.bf16.mxu0 0
  %204 = vmatmul.mubr.bf16.gmra.mxu0 %v129
  %v205 = vpop.f32.mrf.mxu0
  %v206 = vadd.f32 %v76, %v205
  %v207 = vpop.f32.mrf.mxu0
  %v208 = vpop.f32.mrf.mxu0
  %v209 = vadd.f32 %v76, %v208
  %v210 = vpop.f32.mrf.mxu0
  %211 = vmatprep.mubr.bf16.mxu0 0
  %212 = vmatmul.mubr.bf16.gmra.mxu0 %v132
  %v213 = vpop.f32.mrf.mxu0
  %v214 = vadd.f32 %v76, %v213
  %v215 = vpop.f32.mrf.mxu0
  %v216 = vpop.f32.mrf.mxu0
  %v217 = vadd.f32 %v76, %v216
  %v218 = vpop.f32.mrf.mxu0
  %219 = vmatprep.mubr.bf16.mxu0 0
  %220 = vmatmul.mubr.bf16.gmra.mxu0 %v135
  %v221 = vpop.f32.mrf.mxu0
  %v222 = vadd.f32 %v76, %v221
  %v223 = vpop.f32.mrf.mxu0
  %v224 = vpop.f32.mrf.mxu0
  %v225 = vadd.f32 %v76, %v224
  %v226 = vpop.f32.mrf.mxu0
  %227 = vmatprep.mubr.bf16.mxu0 0
  %228 = vmatmul.mubr.bf16.gmra.mxu0 %v138
  %v229 = vpop.f32.mrf.mxu0
  %v230 = vadd.f32 %v76, %v229
  %v231 = vpop.f32.mrf.mxu0
  %v232 = vpop.f32.mrf.mxu0
  %v233 = vadd.f32 %v76, %v232
  %v234 = vpop.f32.mrf.mxu0
  %235 = vmatprep.mubr.bf16.mxu0 0
  %236 = vmatmul.mubr.bf16.gmra.mxu0 %v141
  %v237 = vpop.f32.mrf.mxu0
  %v238 = vadd.f32 %v76, %v237
  %v239 = vpop.f32.mrf.mxu0
  %v240 = vpop.f32.mrf.mxu0
  %v241 = vadd.f32 %v76, %v240
  %v242 = vpop.f32.mrf.mxu0
  %243 = vdwg.mxu0
  %p244 = scmp.eq.s32.totalorder 0, 0
  // Predicated region
  $region14: #{a_call__.2} parent=0 // pred_check
    %p245 = pneg %p244
  $region15: #{a_call__.2} parent=0 // pred_check_branch
    %247 = sbr.rel (%p245) target = $region17
  $region16: #{a_call__.2} parent=0 // pred_region
    %vm248 = vcmask 130048
    %249 = vst.msk [vmem:[%s4] sm:$0xff] %vm248, 0.0
    %250 = vst.msk [vmem:[%s5] sm:$0xff] %vm248, 0.0
  $region17: #{a_call__.2} parent=0 // pred_fallthru
    _
  %v251 = vld [vmem:[%s4] sm:$0xff]
  %vm252 = vcmask 130048
  %v253 = vsel %vm252, %v182, 0.0
  %v254 = vsel %vm252, %v185, 0.0
  %v255 = vadd.f32 %v253, %v254
  %v256 = vsel %vm252, %v190, 0.0
  %v257 = vadd.f32 %v255, %v256
  %v258 = vsel %vm252, %v193, 0.0
  %v259 = vadd.f32 %v257, %v258
  %v260 = vsel %vm252, %v198, 0.0
  %v261 = vadd.f32 %v259, %v260
  %v262 = vsel %vm252, %v201, 0.0
  %v263 = vadd.f32 %v261, %v262
  %v264 = vsel %vm252, %v206, 0.0
  %v265 = vadd.f32 %v263, %v264
  %v266 = vsel %vm252, %v209, 0.0
  %v267 = vadd.f32 %v265, %v266
  %v268 = vsel %vm252, %v214, 0.0
  %v269 = vadd.f32 %v267, %v268
  %v270 = vsel %vm252, %v217, 0.0
  %v271 = vadd.f32 %v269, %v270
  %v272 = vsel %vm252, %v222, 0.0
  %v273 = vadd.f32 %v271, %v272
  %v274 = vsel %vm252, %v225, 0.0
  %v275 = vadd.f32 %v273, %v274
  %v276 = vsel %vm252, %v230, 0.0
  %v277 = vadd.f32 %v275, %v276
  %v278 = vsel %vm252, %v233, 0.0
  %v279 = vadd.f32 %v277, %v278
  %v280 = vsel %vm252, %v238, 0.0
  %v281 = vadd.f32 %v279, %v280
  %v282 = vsel %vm252, %v241, 0.0
  %v283 = vadd.f32 %v281, %v282
  %v284 = vrot.slane %v283, 4
  %v285 = vadd.f32 %v283, %v284
  %v286 = vrot.slane %v285, 2
  %v287 = vadd.f32 %v285, %v286
  %v288 = vrot.slane %v287, 1
  %v289 = vadd.f32 %v287, %v288
  %v290 = vadd.f32 %v251, %v289
  %291 = vst.msk [vmem:[%s4] sm:$0xff] %vm252, %v290
  %v292 = vld [vmem:[%s5] sm:$0xff]
  %v293 = vmul.f32 %v182, %v182
  %v294 = vmul.f32 %v185, %v185
  %v295 = vmul.f32 %v190, %v190
  %v296 = vmul.f32 %v193, %v193
  %v297 = vmul.f32 %v198, %v198
  %v298 = vmul.f32 %v201, %v201
  %v299 = vmul.f32 %v206, %v206
  %v300 = vmul.f32 %v209, %v209
  %v301 = vmul.f32 %v214, %v214
  %v302 = vmul.f32 %v217, %v217
  %v303 = vmul.f32 %v222, %v222
  %v304 = vmul.f32 %v225, %v225
  %v305 = vmul.f32 %v230, %v230
  %v306 = vmul.f32 %v233, %v233
  %v307 = vmul.f32 %v238, %v238
  %v308 = vmul.f32 %v241, %v241
  %v309 = vsel %vm252, %v293, 0.0
  %v310 = vsel %vm252, %v294, 0.0
  %v311 = vadd.f32 %v309, %v310
  %v312 = vsel %vm252, %v295, 0.0
  %v313 = vadd.f32 %v311, %v312
  %v314 = vsel %vm252, %v296, 0.0
  %v315 = vadd.f32 %v313, %v314
  %v316 = vsel %vm252, %v297, 0.0
  %v317 = vadd.f32 %v315, %v316
  %v318 = vsel %vm252, %v298, 0.0
  %v319 = vadd.f32 %v317, %v318
  %v320 = vsel %vm252, %v299, 0.0
  %v321 = vadd.f32 %v319, %v320
  %v322 = vsel %vm252, %v300, 0.0
  %v323 = vadd.f32 %v321, %v322
  %v324 = vsel %vm252, %v301, 0.0
  %v325 = vadd.f32 %v323, %v324
  %v326 = vsel %vm252, %v302, 0.0
  %v327 = vadd.f32 %v325, %v326
  %v328 = vsel %vm252, %v303, 0.0
  %v329 = vadd.f32 %v327, %v328
  %v330 = vsel %vm252, %v304, 0.0
  %v331 = vadd.f32 %v329, %v330
  %v332 = vsel %vm252, %v305, 0.0
  %v333 = vadd.f32 %v331, %v332
  %v334 = vsel %vm252, %v306, 0.0
  %v335 = vadd.f32 %v333, %v334
  %v336 = vsel %vm252, %v307, 0.0
  %v337 = vadd.f32 %v335, %v336
  %v338 = vsel %vm252, %v308, 0.0
  %v339 = vadd.f32 %v337, %v338
  %v340 = vrot.slane %v339, 4
  %v341 = vadd.f32 %v339, %v340
  %v342 = vrot.slane %v341, 2
  %v343 = vadd.f32 %v341, %v342
  %v344 = vrot.slane %v343, 1
  %v345 = vadd.f32 %v343, %v344
  %v346 = vadd.f32 %v292, %v345
  %347 = vst.msk [vmem:[%s5] sm:$0xff] %vm252, %v346
  %v348 = vpack.c.bf16 %v185, %v182
  %v349 = vpack.c.bf16 %v193, %v190
  %v350 = vpack.c.bf16 %v201, %v198
  %v351 = vpack.c.bf16 %v209, %v206
  %v352 = vpack.c.bf16 %v217, %v214
  %v353 = vpack.c.bf16 %v225, %v222
  %v354 = vpack.c.bf16 %v233, %v230
  %v355 = vpack.c.bf16 %v241, %v238
  %v364 = vunpack.c.l.b16 %v348
  %v365 = vunpack.c.h.b16 %v348
  %v366 = vunpack.c.l.b16 %v349
  %v367 = vunpack.c.h.b16 %v349
  %v368 = vunpack.c.l.b16 %v350
  %v369 = vunpack.c.h.b16 %v350
  %v370 = vunpack.c.l.b16 %v351
  %v371 = vunpack.c.h.b16 %v351
  %v372 = vunpack.c.l.b16 %v352
  %v373 = vunpack.c.h.b16 %v352
  %v374 = vunpack.c.l.b16 %v353
  %v375 = vunpack.c.h.b16 %v353
  %v376 = vunpack.c.l.b16 %v354
  %v377 = vunpack.c.h.b16 %v354
  %v378 = vunpack.c.l.b16 %v355
  %v379 = vunpack.c.h.b16 %v355
  %v380 = vpack.c.b16 %v364, %v364
  %v381 = vpack.c.b16 %v365, %v365
  %v382 = vpack.c.b16 %v366, %v366
  %v383 = vpack.c.b16 %v367, %v367
  %v384 = vpack.c.b16 %v368, %v368
  %v385 = vpack.c.b16 %v369, %v369
  %v386 = vpack.c.b16 %v370, %v370
  %v387 = vpack.c.b16 %v371, %v371
  %v388 = vpack.c.b16 %v372, %v372
  %v389 = vpack.c.b16 %v373, %v373
  %v390 = vpack.c.b16 %v374, %v374
  %v391 = vpack.c.b16 %v375, %v375
  %v392 = vpack.c.b16 %v376, %v376
  %v393 = vpack.c.b16 %v377, %v377
  %v394 = vpack.c.b16 %v378, %v378
  %v395 = vpack.c.b16 %v379, %v379
  %vm412 = vcmask 125952
  %413 = vst.msk [vmem:[%s50] sm:$0xf] %vm412, %v380
  %414 = vst.msk [vmem:[%s50 + $0x4] sm:$0xf] %vm412, %v381
  %415 = vst.msk [vmem:[%s50 + $0x8] sm:$0xf] %vm412, %v382
  %416 = vst.msk [vmem:[%s50 + $0xc] sm:$0xf] %vm412, %v383
  %417 = vst.msk [vmem:[%s50 + $0x10] sm:$0xf] %vm412, %v384
  %418 = vst.msk [vmem:[%s50 + $0x14] sm:$0xf] %vm412, %v385
  %419 = vst.msk [vmem:[%s50 + $0x18] sm:$0xf] %vm412, %v386
  %420 = vst.msk [vmem:[%s50 + $0x1c] sm:$0xf] %vm412, %v387
  %421 = vst.msk [vmem:[%s50 + $0x20] sm:$0xf] %vm412, %v388
  %422 = vst.msk [vmem:[%s50 + $0x24] sm:$0xf] %vm412, %v389
  %423 = vst.msk [vmem:[%s50 + $0x28] sm:$0xf] %vm412, %v390
  %424 = vst.msk [vmem:[%s50 + $0x2c] sm:$0xf] %vm412, %v391
  %425 = vst.msk [vmem:[%s50 + $0x30] sm:$0xf] %vm412, %v392
  %426 = vst.msk [vmem:[%s50 + $0x34] sm:$0xf] %vm412, %v393
  %427 = vst.msk [vmem:[%s50 + $0x38] sm:$0xf] %vm412, %v394
  %428 = vst.msk [vmem:[%s50 + $0x3c] sm:$0xf] %vm412, %v395
  %s429 = sadd.s32 0, 0
  %s430 = smul.u32 16, %s429
  %p431 = scmp.lt.s32.totalorder %s430, 15
  %s432 = scalar_select %p431, %s430, 15
  %s433 = smul.addr %s432, 4
  %s434 = scalar_lea.vmem %s3, %s433
  // Predicated region
  $region18: #{a_call__.2} parent=0 // pred_check
    _
  $region19: #{a_call__.2} parent=0 // pred_check_branch
    %436 = sbr.rel (0) target = $region21
  $region20: #{a_call__.2} parent=0 // pred_region
    %s437 = sadd.s32 0, 0
    %s438 = smul.u32 16, %s437
  $region21: #{a_call__.2} parent=0 // pred_fallthru
    _
  // Predicated region
  $region22: #{a_call__.2} parent=0 // pred_check
    _
  $region23: #{a_call__.2} parent=0 // pred_check_branch
    %440 = sbr.rel (0) target = $region25
  $region24: #{a_call__.2} parent=0 // pred_region
    _
  $region25: #{a_call__.2} parent=0 // pred_fallthru
    _
  // Predicated region
  $region26: #{a_call__.2} parent=0 // pred_check
    _
  $region27: #{a_call__.2} parent=0 // pred_check_branch
    %442 = sbr.rel (0) target = $region29
  $region28: #{a_call__.2} parent=0 // pred_region
    _
  $region29: #{a_call__.2} parent=0 // pred_fallthru
    _
  // Predicated region
  $region30: #{a_call__.2} parent=0 // pred_check
    _
  $region31: #{a_call__.2} parent=0 // pred_check_branch
    %444 = sbr.rel (0) target = $region33
  $region32: #{a_call__.2} parent=0 // pred_region
    %s445 = sadd.s32 0, 0
    %s446 = smul.u32 16, %s445
    %p447 = scmp.lt.s32.totalorder %s446, 15
    %s448 = scalar_select %p447, %s446, 15
    %s449 = smul.addr %s448, 4
    %s450 = scalar_lea.vmem %s3, %s449
  $region33: #{a_call__.2} parent=0 // pred_fallthru
    _
  // Predicated region
  $region34: #{a_call__.2} parent=0 // pred_check
    _
  $region35: #{a_call__.2} parent=0 // pred_check_branch
    %452 = sbr.rel (0) target = $region37
  $region36: #{a_call__.2} parent=0 // pred_region
    _
  $region37: #{a_call__.2} parent=0 // pred_fallthru
    _
  // Predicated region
  $region38: #{a_call__.2} parent=0 // pred_check
    _
  $region39: #{a_call__.2} parent=0 // pred_check_branch
    %454 = sbr.rel (0) target = $region41
  $region40: #{a_call__.2} parent=0 // pred_region
    _
  $region41: #{a_call__.2} parent=0 // pred_fallthru
    _

// kernel: a_call__.3
$region0: #{a_call__.3}
  #allocation0 [shape = 'u32[]', space=smem, size = 0x4, offset = 0x4, fixed_abs, tag = 'smem constant byte address 0x4 - core index']
  #allocation1 [shape = 'u32[144,128]{1,0:T(1,128)}', space=vmem, size = 0x12000, scoped, tag = 'internal scratch']
  %s0 = inlined_call_operand.vmem [shape: bf16[128,16], index: 0, kind: input, shape index: {}]
  %s1 = inlined_call_operand.vmem [shape: bf16[1,16], index: 1, kind: input, shape index: {}]
  %s2 = inlined_call_operand.vmem [shape: bf16[1,16], index: 2, kind: input, shape index: {}]
  %s3 = inlined_call_operand.vmem [shape: bf16[16,128], index: 3, kind: input, shape index: {}]
  %s4 = inlined_call_operand.vmem [shape: f32[1,128], index: 4, kind: input, shape index: {}]
  %s5 = inlined_call_operand.vmem [shape: f32[16,128], index: 5, kind: output, shape index: {0}]
  %s6 = inlined_call_operand.vmem [shape: f32[16,128], index: 6, kind: output, shape index: {1}]
  %s7 = inlined_call_operand.vmem [shape: f32[1,8,128], index: 7, kind: output, shape index: {2}]
  %s8 = inlined_call_operand.vmem [shape: f32[1,8,128], index: 8, kind: output, shape index: {3}]
  %9 = xla_tuple %s5, %s6, %s7, %s8
  %s10 = sld [smem:[#allocation0]]
  $region58: #{a_call__.3} parent=0
    _
  %s12 = ssub.s32 1, %s10
  %s13 = scalar_select 0, %s12, %s10
  // Predicated region
  $region2: #{a_call__.3} parent=0 // pred_check
    _
  $region3: #{a_call__.3} parent=0 // pred_check_branch
    %15 = sbr.rel (0) target = $region5
  $region4: #{a_call__.3} parent=0 // pred_region
    %s16 = sadd.s32 0, 0
    %s17 = smul.u32 16, %s16
    %p18 = scmp.lt.s32.totalorder %s17, 15
    %s19 = scalar_select %p18, %s17, 15
    %s20 = smul.addr %s19, 4
    %s21 = scalar_lea.vmem %s0, %s20
    %s22 = sadd.s32 0, 0
    %s23 = smul.u32 16, %s22
  $region5: #{a_call__.3} parent=0 // pred_fallthru
    _
  // Predicated region
  $region6: #{a_call__.3} parent=0 // pred_check
    _
  $region7: #{a_call__.3} parent=0 // pred_check_branch
    %25 = sbr.rel (0) target = $region9
  $region8: #{a_call__.3} parent=0 // pred_region
    _
  $region9: #{a_call__.3} parent=0 // pred_fallthru
    _
  // Predicated region
  $region10: #{a_call__.3} parent=0 // pred_check
    _
  $region11: #{a_call__.3} parent=0 // pred_check_branch
    %27 = sbr.rel (0) target = $region13
  $region12: #{a_call__.3} parent=0 // pred_region
    _
  $region13: #{a_call__.3} parent=0 // pred_fallthru
    _
  // Predicated region
  $region14: #{a_call__.3} parent=0 // pred_check
    _
  $region15: #{a_call__.3} parent=0 // pred_check_branch
    %29 = sbr.rel (0) target = $region17
  $region16: #{a_call__.3} parent=0 // pred_region
    _
  $region17: #{a_call__.3} parent=0 // pred_fallthru
    _
  // Predicated region
  $region18: #{a_call__.3} parent=0 // pred_check
    _
  $region19: #{a_call__.3} parent=0 // pred_check_branch
    %31 = sbr.rel (0) target = $region21
  $region20: #{a_call__.3} parent=0 // pred_region
    _
  $region21: #{a_call__.3} parent=0 // pred_fallthru
    _
  %s32 = sadd.s32 0, 0
  %s33 = smul.u32 16, %s32
  %p34 = scmp.lt.s32.totalorder %s33, 15
  %s35 = scalar_select %p34, %s33, 15
  %s36 = smul.addr %s35, 4
  %s37 = scalar_lea.vmem %s0, %s36
  %s38 = sadd.s32 0, 0
  %s39 = smul.u32 2, %s38
  %p40 = scmp.lt.s32.totalorder %s39, 1
  %s41 = scalar_select %p40, %s39, 1
  %s42 = smul.addr %s41, 8
  %s43 = scalar_lea.vmem %s5, %s42
  %s44 = sadd.s32 0, 0
  %s45 = smul.u32 2, %s44
  %p46 = scmp.lt.s32.totalorder %s45, 1
  %s47 = scalar_select %p46, %s45, 1
  %s48 = smul.addr %s47, 8
  %s49 = scalar_lea.vmem %s6, %s48
  %s50 = sadd.s32 0, 0
  %s51 = smul.u32 16, %s50
  %p52 = scmp.lt.s32.totalorder %s51, 15
  %s53 = scalar_select %p52, %s51, 15
  %s54 = smul.addr %s53, 4
  %s55 = scalar_lea.vmem %s0, %s54
  %s56 = sadd.s32 0, 0
  %s57 = smul.u32 16, %s56
  %s58 = sadd.s32 0, 0
  %s59 = smul.u32 2, %s58
  %p60 = scmp.lt.s32.totalorder %s59, 1
  %s61 = scalar_select %p60, %s59, 1
  %s62 = smul.addr %s61, 8
  %s63 = scalar_lea.vmem %s5, %s62
  %s64 = sadd.s32 0, 0
  %s65 = smul.u32 2, %s64
  %s66 = sadd.s32 0, 0
  %s67 = smul.u32 2, %s66
  %p68 = scmp.lt.s32.totalorder %s67, 1
  %s69 = scalar_select %p68, %s67, 1
  %s70 = smul.addr %s69, 8
  %s71 = scalar_lea.vmem %s6, %s70
  %s72 = sadd.s32 0, 0
  %s73 = smul.u32 2, %s72
  %v75 = vld [vmem:[%s55] sm:$0xf]
  %v76 = vld [vmem:[%s55 + $0x4] sm:$0xf]
  %v77 = vld [vmem:[%s55 + $0x8] sm:$0xf]
  %v78 = vld [vmem:[%s55 + $0xc] sm:$0xf]
  %v79 = vld [vmem:[%s55 + $0x10] sm:$0xf]
  %v80 = vld [vmem:[%s55 + $0x14] sm:$0xf]
  %v81 = vld [vmem:[%s55 + $0x18] sm:$0xf]
  %v82 = vld [vmem:[%s55 + $0x1c] sm:$0xf]
  %v83 = vld [vmem:[%s55 + $0x20] sm:$0xf]
  %v84 = vld [vmem:[%s55 + $0x24] sm:$0xf]
  %v85 = vld [vmem:[%s55 + $0x28] sm:$0xf]
  %v86 = vld [vmem:[%s55 + $0x2c] sm:$0xf]
  %v87 = vld [vmem:[%s55 + $0x30] sm:$0xf]
  %v88 = vld [vmem:[%s55 + $0x34] sm:$0xf]
  %v89 = vld [vmem:[%s55 + $0x38] sm:$0xf]
  %v90 = vld [vmem:[%s55 + $0x3c] sm:$0xf]
  %v91 = vld [vmem:[%s1] sm:$0x1]
  %v93 = vpack.i.b16 %v91, %v91
  %v95 = vlaneseq
  %v96 = vshrl.u32 %v95, 7
  %v97 = vsub.s32 0, %v96
  %v98 = vrot.slane %v93, %v97
  %v100 = vunpack.c.l.b16 %v98
  %v101 = vpack.c.b16 %v100, %v100
  %v103 = vmul.bf16 %v75, %v101
  %v104 = vmul.bf16 %v76, %v101
  %v105 = vmul.bf16 %v77, %v101
  %v106 = vmul.bf16 %v78, %v101
  %v107 = vmul.bf16 %v79, %v101
  %v108 = vmul.bf16 %v80, %v101
  %v109 = vmul.bf16 %v81, %v101
  %v110 = vmul.bf16 %v82, %v101
  %v111 = vmul.bf16 %v83, %v101
  %v112 = vmul.bf16 %v84, %v101
  %v113 = vmul.bf16 %v85, %v101
  %v114 = vmul.bf16 %v86, %v101
  %v115 = vmul.bf16 %v87, %v101
  %v116 = vmul.bf16 %v88, %v101
  %v117 = vmul.bf16 %v89, %v101
  %v118 = vmul.bf16 %v90, %v101
  %v119 = vld [vmem:[%s2] sm:$0x1]
  %v121 = vpack.i.b16 %v119, %v119
  %v123 = vlaneseq
  %v124 = vshrl.u32 %v123, 7
  %v125 = vsub.s32 0, %v124
  %v126 = vrot.slane %v121, %v125
  %v128 = vunpack.c.l.b16 %v126
  %v129 = vpack.c.b16 %v128, %v128
  %v131 = vadd.bf16 %v103, %v129
  %v132 = vadd.bf16 %v104, %v129
  %v133 = vadd.bf16 %v105, %v129
  %v134 = vadd.bf16 %v106, %v129
  %v135 = vadd.bf16 %v107, %v129
  %v136 = vadd.bf16 %v108, %v129
  %v137 = vadd.bf16 %v109, %v129
  %v138 = vadd.bf16 %v110, %v129
  %v139 = vadd.bf16 %v111, %v129
  %v140 = vadd.bf16 %v112, %v129
  %v141 = vadd.bf16 %v113, %v129
  %v142 = vadd.bf16 %v114, %v129
  %v143 = vadd.bf16 %v115, %v129
  %v144 = vadd.bf16 %v116, %v129
  %v145 = vadd.bf16 %v117, %v129
  %v146 = vadd.bf16 %v118, %v129
  %v147 = vmax.bf16 %v131, 0
  %v148 = vmax.bf16 %v132, 0
  %v149 = vmax.bf16 %v133, 0
  %v150 = vmax.bf16 %v134, 0
  %v151 = vmax.bf16 %v135, 0
  %v152 = vmax.bf16 %v136, 0
  %v153 = vmax.bf16 %v137, 0
  %v154 = vmax.bf16 %v138, 0
  %v155 = vmax.bf16 %v139, 0
  %v156 = vmax.bf16 %v140, 0
  %v157 = vmax.bf16 %v141, 0
  %v158 = vmax.bf16 %v142, 0
  %v159 = vmax.bf16 %v143, 0
  %v160 = vmax.bf16 %v144, 0
  %v161 = vmax.bf16 %v145, 0
  %v162 = vmax.bf16 %v146, 0
  %v163 = vld [vmem:[%s3] sm:$0xf]
  %v164 = vld [vmem:[%s3 + $0x4] sm:$0xf]
  %v165 = vld [vmem:[%s4] sm:$0x1]
  %v167 = vlaneseq
  %v168 = vshrl.u32 %v167, 7
  %v169 = vsub.s32 0, %v168
  %v170 = vrot.slane %v165, %v169
  %v188 = vunpack.c.l.b16 %v147
  %v189 = vunpack.c.l.b16 %v148
  %v190 = vunpack.c.l.b16 %v149
  %v191 = vunpack.c.l.b16 %v150
  %v192 = vunpack.c.l.b16 %v151
  %v193 = vunpack.c.l.b16 %v152
  %v194 = vunpack.c.l.b16 %v153
  %v195 = vunpack.c.l.b16 %v154
  %v196 = vunpack.c.l.b16 %v155
  %v197 = vunpack.c.l.b16 %v156
  %v198 = vunpack.c.l.b16 %v157
  %v199 = vunpack.c.l.b16 %v158
  %v200 = vunpack.c.l.b16 %v159
  %v201 = vunpack.c.l.b16 %v160
  %v202 = vunpack.c.l.b16 %v161
  %v203 = vunpack.c.l.b16 %v162
  %v204 = vpack.c.b16 %v189, %v188
  %v205 = vpack.c.b16 %v191, %v190
  %v206 = vpack.c.b16 %v193, %v192
  %v207 = vpack.c.b16 %v195, %v194
  %v208 = vpack.c.b16 %v197, %v196
  %v209 = vpack.c.b16 %v199, %v198
  %v210 = vpack.c.b16 %v201, %v200
  %v211 = vpack.c.b16 %v203, %v202
  %v214 = vunpack.c.l.b16 %v163
  %v215 = vunpack.c.l.b16 %v164
  %v216 = vpack.c.b16 %v215, %v214
  %vm218 = vcmask 130048
  %v220 = vsel %vm218, %v204, 0
  %v223 = vsel %vm218, %v205, 0
  %v226 = vsel %vm218, %v206, 0
  %v229 = vsel %vm218, %v207, 0
  %v232 = vsel %vm218, %v208, 0
  %v235 = vsel %vm218, %v209, 0
  %v238 = vsel %vm218, %v210, 0
  %v241 = vsel %vm218, %v211, 0
  %243 = vmatprep.subr.bf16.mxu0 0
  %244 = vmatpush1.bf16.msra.mxu0 0
  %245 = vmatprep.subr.bf16.mxu0 0
  %246 = vmatpush1.bf16.msra.mxu0 0
  %247 = vmatprep.subr.bf16.mxu0 0
  %248 = vmatpush1.bf16.msra.mxu0 0
  %249 = vmatprep.subr.bf16.mxu0 0
  %250 = vmatpush1.bf16.msra.mxu0 0
  %251 = vmatprep.subr.bf16.mxu0 0
  %252 = vmatpush1.bf16.msra.mxu0 0
  %253 = vmatprep.subr.bf16.mxu0 0
  %254 = vmatpush1.bf16.msra.mxu0 0
  %255 = vmatprep.subr.bf16.mxu0 0
  %256 = vmatpush1.bf16.msra.mxu0 0
  %257 = vmatprep.subr.bf16.mxu0 0
  %258 = vmatpush1.bf16.msra.mxu0 %v216
  %259 = vmatprep.subr.bf16.mxu0 0
  %260 = vmatpush2.bf16.msra.mxu0 0
  %261 = vmatprep.subr.bf16.mxu0 0
  %262 = vmatpush2.bf16.msra.mxu0 0
  %263 = vmatprep.subr.bf16.mxu0 0
  %264 = vmatpush2.bf16.msra.mxu0 0
  %265 = vmatprep.subr.bf16.mxu0 0
  %266 = vmatpush2.bf16.msra.mxu0 0
  %267 = vmatprep.subr.bf16.mxu0 0
  %268 = vmatpush2.bf16.msra.mxu0 0
  %269 = vmatprep.subr.bf16.mxu0 0
  %270 = vmatpush2.bf16.msra.mxu0 0
  %271 = vmatprep.subr.bf16.mxu0 0
  %272 = vmatpush2.bf16.msra.mxu0 0
  %273 = vmatprep.subr.bf16.mxu0 0
  %274 = vmatpush2.bf16.msra.mxu0 0
  %275 = vmatprep.mubr.bf16.mxu0 0
  %276 = vmatmul.mubr.bf16.gmra.mxu0 %v220
  %v277 = vpop.f32.mrf.mxu0
  %v278 = vadd.f32 %v170, %v277
  %v279 = vpop.f32.mrf.mxu0
  %v280 = vpop.f32.mrf.mxu0
  %v281 = vadd.f32 %v170, %v280
  %v282 = vpop.f32.mrf.mxu0
  %283 = vmatprep.mubr.bf16.mxu0 0
  %284 = vmatmul.mubr.bf16.gmra.mxu0 %v223
  %v285 = vpop.f32.mrf.mxu0
  %v286 = vadd.f32 %v170, %v285
  %v287 = vpop.f32.mrf.mxu0
  %v288 = vpop.f32.mrf.mxu0
  %v289 = vadd.f32 %v170, %v288
  %v290 = vpop.f32.mrf.mxu0
  %291 = vmatprep.mubr.bf16.mxu0 0
  %292 = vmatmul.mubr.bf16.gmra.mxu0 %v226
  %v293 = vpop.f32.mrf.mxu0
  %v294 = vadd.f32 %v170, %v293
  %v295 = vpop.f32.mrf.mxu0
  %v296 = vpop.f32.mrf.mxu0
  %v297 = vadd.f32 %v170, %v296
  %v298 = vpop.f32.mrf.mxu0
  %299 = vmatprep.mubr.bf16.mxu0 0
  %300 = vmatmul.mubr.bf16.gmra.mxu0 %v229
  %v301 = vpop.f32.mrf.mxu0
  %v302 = vadd.f32 %v170, %v301
  %v303 = vpop.f32.mrf.mxu0
  %v304 = vpop.f32.mrf.mxu0
  %v305 = vadd.f32 %v170, %v304
  %v306 = vpop.f32.mrf.mxu0
  %307 = vmatprep.mubr.bf16.mxu0 0
  %308 = vmatmul.mubr.bf16.gmra.mxu0 %v232
  %v309 = vpop.f32.mrf.mxu0
  %v310 = vadd.f32 %v170, %v309
  %v311 = vpop.f32.mrf.mxu0
  %v312 = vpop.f32.mrf.mxu0
  %v313 = vadd.f32 %v170, %v312
  %v314 = vpop.f32.mrf.mxu0
  %315 = vmatprep.mubr.bf16.mxu0 0
  %316 = vmatmul.mubr.bf16.gmra.mxu0 %v235
  %v317 = vpop.f32.mrf.mxu0
  %v318 = vadd.f32 %v170, %v317
  %v319 = vpop.f32.mrf.mxu0
  %v320 = vpop.f32.mrf.mxu0
  %v321 = vadd.f32 %v170, %v320
  %v322 = vpop.f32.mrf.mxu0
  %323 = vmatprep.mubr.bf16.mxu0 0
  %324 = vmatmul.mubr.bf16.gmra.mxu0 %v238
  %v325 = vpop.f32.mrf.mxu0
  %v326 = vadd.f32 %v170, %v325
  %v327 = vpop.f32.mrf.mxu0
  %v328 = vpop.f32.mrf.mxu0
  %v329 = vadd.f32 %v170, %v328
  %v330 = vpop.f32.mrf.mxu0
  %331 = vmatprep.mubr.bf16.mxu0 0
  %332 = vmatmul.mubr.bf16.gmra.mxu0 %v241
  %v333 = vpop.f32.mrf.mxu0
  %v334 = vadd.f32 %v170, %v333
  %v335 = vpop.f32.mrf.mxu0
  %v336 = vpop.f32.mrf.mxu0
  %v337 = vadd.f32 %v170, %v336
  %v338 = vpop.f32.mrf.mxu0
  %339 = vdwg.mxu0
  %p340 = scmp.eq.s32.totalorder 0, 0
  // Predicated region
  $region22: #{a_call__.3} parent=0 // pred_check
    %p341 = pneg %p340
  $region23: #{a_call__.3} parent=0 // pred_check_branch
    %343 = sbr.rel (%p341) target = $region25
  $region24: #{a_call__.3} parent=0 // pred_region
    %344 = vst [vmem:[%s7] sm:$0xff] 0.0
    %345 = vst [vmem:[%s8] sm:$0xff] 0.0
  $region25: #{a_call__.3} parent=0 // pred_fallthru
    _
  %v346 = vld [vmem:[%s7] sm:$0xff]
  %v347 = vadd.f32 %v278, %v281
  %v348 = vadd.f32 %v347, %v286
  %v349 = vadd.f32 %v348, %v289
  %v350 = vadd.f32 %v349, %v294
  %v351 = vadd.f32 %v350, %v297
  %v352 = vadd.f32 %v351, %v302
  %v353 = vadd.f32 %v352, %v305
  %v354 = vadd.f32 %v353, %v310
  %v355 = vadd.f32 %v354, %v313
  %v356 = vadd.f32 %v355, %v318
  %v357 = vadd.f32 %v356, %v321
  %v358 = vadd.f32 %v357, %v326
  %v359 = vadd.f32 %v358, %v329
  %v360 = vadd.f32 %v359, %v334
  %v361 = vadd.f32 %v360, %v337
  %v362 = vrot.slane %v361, 4
  %v363 = vadd.f32 %v361, %v362
  %v364 = vrot.slane %v363, 2
  %v365 = vadd.f32 %v363, %v364
  %v366 = vrot.slane %v365, 1
  %v367 = vadd.f32 %v365, %v366
  %v368 = vadd.f32 %v346, %v367
  %369 = vst [vmem:[%s7] sm:$0xff] %v368
  %v370 = vld [vmem:[%s8] sm:$0xff]
  %v371 = vmul.f32 %v278, %v278
  %v372 = vmul.f32 %v281, %v281
  %v373 = vmul.f32 %v286, %v286
  %v374 = vmul.f32 %v289, %v289
  %v375 = vmul.f32 %v294, %v294
  %v376 = vmul.f32 %v297, %v297
  %v377 = vmul.f32 %v302, %v302
  %v378 = vmul.f32 %v305, %v305
  %v379 = vmul.f32 %v310, %v310
  %v380 = vmul.f32 %v313, %v313
  %v381 = vmul.f32 %v318, %v318
  %v382 = vmul.f32 %v321, %v321
  %v383 = vmul.f32 %v326, %v326
  %v384 = vmul.f32 %v329, %v329
  %v385 = vmul.f32 %v334, %v334
  %v386 = vmul.f32 %v337, %v337
  %v387 = vadd.f32 %v371, %v372
  %v388 = vadd.f32 %v387, %v373
  %v389 = vadd.f32 %v388, %v374
  %v390 = vadd.f32 %v389, %v375
  %v391 = vadd.f32 %v390, %v376
  %v392 = vadd.f32 %v391, %v377
  %v393 = vadd.f32 %v392, %v378
  %v394 = vadd.f32 %v393, %v379
  %v395 = vadd.f32 %v394, %v380
  %v396 = vadd.f32 %v395, %v381
  %v397 = vadd.f32 %v396, %v382
  %v398 = vadd.f32 %v397, %v383
  %v399 = vadd.f32 %v398, %v384
  %v400 = vadd.f32 %v399, %v385
  %v401 = vadd.f32 %v400, %v386
  %v402 = vrot.slane %v401, 4
  %v403 = vadd.f32 %v401, %v402
  %v404 = vrot.slane %v403, 2
  %v405 = vadd.f32 %v403, %v404
  %v406 = vrot.slane %v405, 1
  %v407 = vadd.f32 %v405, %v406
  %v408 = vadd.f32 %v370, %v407
  %409 = vst [vmem:[%s8] sm:$0xff] %v408
  %v410 = vrot.slane %v278, 4
  %v411 = vmax.f32 %v278, %v410
  %v412 = vrot.slane %v411, 2
  %v413 = vmax.f32 %v411, %v412
  %v414 = vrot.slane %v413, 1
  %v415 = vmax.f32 %v413, %v414
  %v416 = vrot.slane %v281, 4
  %v417 = vmax.f32 %v281, %v416
  %v418 = vrot.slane %v417, 2
  %v419 = vmax.f32 %v417, %v418
  %v420 = vrot.slane %v419, 1
  %v421 = vmax.f32 %v419, %v420
  %v422 = vrot.slane %v286, 4
  %v423 = vmax.f32 %v286, %v422
  %v424 = vrot.slane %v423, 2
  %v425 = vmax.f32 %v423, %v424
  %v426 = vrot.slane %v425, 1
  %v427 = vmax.f32 %v425, %v426
  %v428 = vrot.slane %v289, 4
  %v429 = vmax.f32 %v289, %v428
  %v430 = vrot.slane %v429, 2
  %v431 = vmax.f32 %v429, %v430
  %v432 = vrot.slane %v431, 1
  %v433 = vmax.f32 %v431, %v432
  %v434 = vrot.slane %v294, 4
  %v435 = vmax.f32 %v294, %v434
  %v436 = vrot.slane %v435, 2
  %v437 = vmax.f32 %v435, %v436
  %v438 = vrot.slane %v437, 1
  %v439 = vmax.f32 %v437, %v438
  %v440 = vrot.slane %v297, 4
  %v441 = vmax.f32 %v297, %v440
  %v442 = vrot.slane %v441, 2
  %v443 = vmax.f32 %v441, %v442
  %v444 = vrot.slane %v443, 1
  %v445 = vmax.f32 %v443, %v444
  %v446 = vrot.slane %v302, 4
  %v447 = vmax.f32 %v302, %v446
  %v448 = vrot.slane %v447, 2
  %v449 = vmax.f32 %v447, %v448
  %v450 = vrot.slane %v449, 1
  %v451 = vmax.f32 %v449, %v450
  %v452 = vrot.slane %v305, 4
  %v453 = vmax.f32 %v305, %v452
  %v454 = vrot.slane %v453, 2
  %v455 = vmax.f32 %v453, %v454
  %v456 = vrot.slane %v455, 1
  %v457 = vmax.f32 %v455, %v456
  %v458 = vrot.slane %v310, 4
  %v459 = vmax.f32 %v310, %v458
  %v460 = vrot.slane %v459, 2
  %v461 = vmax.f32 %v459, %v460
  %v462 = vrot.slane %v461, 1
  %v463 = vmax.f32 %v461, %v462
  %v464 = vrot.slane %v313, 4
  %v465 = vmax.f32 %v313, %v464
  %v466 = vrot.slane %v465, 2
  %v467 = vmax.f32 %v465, %v466
  %v468 = vrot.slane %v467, 1
  %v469 = vmax.f32 %v467, %v468
  %v470 = vrot.slane %v318, 4
  %v471 = vmax.f32 %v318, %v470
  %v472 = vrot.slane %v471, 2
  %v473 = vmax.f32 %v471, %v472
  %v474 = vrot.slane %v473, 1
  %v475 = vmax.f32 %v473, %v474
  %v476 = vrot.slane %v321, 4
  %v477 = vmax.f32 %v321, %v476
  %v478 = vrot.slane %v477, 2
  %v479 = vmax.f32 %v477, %v478
  %v480 = vrot.slane %v479, 1
  %v481 = vmax.f32 %v479, %v480
  %v482 = vrot.slane %v326, 4
  %v483 = vmax.f32 %v326, %v482
  %v484 = vrot.slane %v483, 2
  %v485 = vmax.f32 %v483, %v484
  %v486 = vrot.slane %v485, 1
  %v487 = vmax.f32 %v485, %v486
  %v488 = vrot.slane %v329, 4
  %v489 = vmax.f32 %v329, %v488
  %v490 = vrot.slane %v489, 2
  %v491 = vmax.f32 %v489, %v490
  %v492 = vrot.slane %v491, 1
  %v493 = vmax.f32 %v491, %v492
  %v494 = vrot.slane %v334, 4
  %v495 = vmax.f32 %v334, %v494
  %v496 = vrot.slane %v495, 2
  %v497 = vmax.f32 %v495, %v496
  %v498 = vrot.slane %v497, 1
  %v499 = vmax.f32 %v497, %v498
  %v500 = vrot.slane %v337, 4
  %v501 = vmax.f32 %v337, %v500
  %v502 = vrot.slane %v501, 2
  %v503 = vmax.f32 %v501, %v502
  %v504 = vrot.slane %v503, 1
  %v505 = vmax.f32 %v503, %v504
  %vm522 = vcmask 1041409
  %v523 = vsel %vm522, %v421, %v415
  %vm524 = vcmask 1042434
  %v525 = vsel %vm524, %v427, %v523
  %vm526 = vcmask 1043459
  %v527 = vsel %vm526, %v433, %v525
  %vm528 = vcmask 1044484
  %v529 = vsel %vm528, %v439, %v527
  %vm530 = vcmask 1045509
  %v531 = vsel %vm530, %v445, %v529
  %vm532 = vcmask 1046534
  %v533 = vsel %vm532, %v451, %v531
  %vm534 = vcmask 1047559
  %v535 = vsel %vm534, %v457, %v533
  %v536 = vsel %vm522, %v469, %v463
  %v537 = vsel %vm524, %v475, %v536
  %v538 = vsel %vm526, %v481, %v537
  %v539 = vsel %vm528, %v487, %v538
  %v540 = vsel %vm530, %v493, %v539
  %v541 = vsel %vm532, %v499, %v540
  %v542 = vsel %vm534, %v505, %v541
  %545 = vst [vmem:[%s63] sm:$0xff] %v535
  %546 = vst [vmem:[%s63 + $0x8] sm:$0xff] %v542
  %v547 = vrot.slane %v278, 4
  %v548 = vmin.f32 %v278, %v547
  %v549 = vrot.slane %v548, 2
  %v550 = vmin.f32 %v548, %v549
  %v551 = vrot.slane %v550, 1
  %v552 = vmin.f32 %v550, %v551
  %v553 = vrot.slane %v281, 4
  %v554 = vmin.f32 %v281, %v553
  %v555 = vrot.slane %v554, 2
  %v556 = vmin.f32 %v554, %v555
  %v557 = vrot.slane %v556, 1
  %v558 = vmin.f32 %v556, %v557
  %v559 = vrot.slane %v286, 4
  %v560 = vmin.f32 %v286, %v559
  %v561 = vrot.slane %v560, 2
  %v562 = vmin.f32 %v560, %v561
  %v563 = vrot.slane %v562, 1
  %v564 = vmin.f32 %v562, %v563
  %v565 = vrot.slane %v289, 4
  %v566 = vmin.f32 %v289, %v565
  %v567 = vrot.slane %v566, 2
  %v568 = vmin.f32 %v566, %v567
  %v569 = vrot.slane %v568, 1
  %v570 = vmin.f32 %v568, %v569
  %v571 = vrot.slane %v294, 4
  %v572 = vmin.f32 %v294, %v571
  %v573 = vrot.slane %v572, 2
  %v574 = vmin.f32 %v572, %v573
  %v575 = vrot.slane %v574, 1
  %v576 = vmin.f32 %v574, %v575
  %v577 = vrot.slane %v297, 4
  %v578 = vmin.f32 %v297, %v577
  %v579 = vrot.slane %v578, 2
  %v580 = vmin.f32 %v578, %v579
  %v581 = vrot.slane %v580, 1
  %v582 = vmin.f32 %v580, %v581
  %v583 = vrot.slane %v302, 4
  %v584 = vmin.f32 %v302, %v583
  %v585 = vrot.slane %v584, 2
  %v586 = vmin.f32 %v584, %v585
  %v587 = vrot.slane %v586, 1
  %v588 = vmin.f32 %v586, %v587
  %v589 = vrot.slane %v305, 4
  %v590 = vmin.f32 %v305, %v589
  %v591 = vrot.slane %v590, 2
  %v592 = vmin.f32 %v590, %v591
  %v593 = vrot.slane %v592, 1
  %v594 = vmin.f32 %v592, %v593
  %v595 = vrot.slane %v310, 4
  %v596 = vmin.f32 %v310, %v595
  %v597 = vrot.slane %v596, 2
  %v598 = vmin.f32 %v596, %v597
  %v599 = vrot.slane %v598, 1
  %v600 = vmin.f32 %v598, %v599
  %v601 = vrot.slane %v313, 4
  %v602 = vmin.f32 %v313, %v601
  %v603 = vrot.slane %v602, 2
  %v604 = vmin.f32 %v602, %v603
  %v605 = vrot.slane %v604, 1
  %v606 = vmin.f32 %v604, %v605
  %v607 = vrot.slane %v318, 4
  %v608 = vmin.f32 %v318, %v607
  %v609 = vrot.slane %v608, 2
  %v610 = vmin.f32 %v608, %v609
  %v611 = vrot.slane %v610, 1
  %v612 = vmin.f32 %v610, %v611
  %v613 = vrot.slane %v321, 4
  %v614 = vmin.f32 %v321, %v613
  %v615 = vrot.slane %v614, 2
  %v616 = vmin.f32 %v614, %v615
  %v617 = vrot.slane %v616, 1
  %v618 = vmin.f32 %v616, %v617
  %v619 = vrot.slane %v326, 4
  %v620 = vmin.f32 %v326, %v619
  %v621 = vrot.slane %v620, 2
  %v622 = vmin.f32 %v620, %v621
  %v623 = vrot.slane %v622, 1
  %v624 = vmin.f32 %v622, %v623
  %v625 = vrot.slane %v329, 4
  %v626 = vmin.f32 %v329, %v625
  %v627 = vrot.slane %v626, 2
  %v628 = vmin.f32 %v626, %v627
  %v629 = vrot.slane %v628, 1
  %v630 = vmin.f32 %v628, %v629
  %v631 = vrot.slane %v334, 4
  %v632 = vmin.f32 %v334, %v631
  %v633 = vrot.slane %v632, 2
  %v634 = vmin.f32 %v632, %v633
  %v635 = vrot.slane %v634, 1
  %v636 = vmin.f32 %v634, %v635
  %v637 = vrot.slane %v337, 4
  %v638 = vmin.f32 %v337, %v637
  %v639 = vrot.slane %v638, 2
  %v640 = vmin.f32 %v638, %v639
  %v641 = vrot.slane %v640, 1
  %v642 = vmin.f32 %v640, %v641
  %v659 = vsel %vm522, %v558, %v552
  %v660 = vsel %vm524, %v564, %v659
  %v661 = vsel %vm526, %v570, %v660
  %v662 = vsel %vm528, %v576, %v661
  %v663 = vsel %vm530, %v582, %v662
  %v664 = vsel %vm532, %v588, %v663
  %v665 = vsel %vm534, %v594, %v664
  %v666 = vsel %vm522, %v606, %v600
  %v667 = vsel %vm524, %v612, %v666
  %v668 = vsel %vm526, %v618, %v667
  %v669 = vsel %vm528, %v624, %v668
  %v670 = vsel %vm530, %v630, %v669
  %v671 = vsel %vm532, %v636, %v670
  %v672 = vsel %vm534, %v642, %v671
  %675 = vst [vmem:[%s71] sm:$0xff] %v665
  %676 = vst [vmem:[%s71 + $0x8] sm:$0xff] %v672
  %s677 = sadd.s32 0, 0
  %s678 = smul.u32 2, %s677
  %p679 = scmp.lt.s32.totalorder %s678, 1
  %s680 = scalar_select %p679, %s678, 1
  %s681 = smul.addr %s680, 8
  %s682 = scalar_lea.vmem %s5, %s681
  %s683 = sadd.s32 0, 0
  %s684 = smul.u32 2, %s683
  %p685 = scmp.lt.s32.totalorder %s684, 1
  %s686 = scalar_select %p685, %s684, 1
  %s687 = smul.addr %s686, 8
  %s688 = scalar_lea.vmem %s6, %s687
  // Predicated region
  $region26: #{a_call__.3} parent=0 // pred_check
    _
  $region27: #{a_call__.3} parent=0 // pred_check_branch
    %690 = sbr.rel (0) target = $region29
  $region28: #{a_call__.3} parent=0 // pred_region
    %s691 = sadd.s32 0, 0
    %s692 = smul.u32 2, %s691
  $region29: #{a_call__.3} parent=0 // pred_fallthru
    _
  // Predicated region
  $region30: #{a_call__.3} parent=0 // pred_check
    _
  $region31: #{a_call__.3} parent=0 // pred_check_branch
    %694 = sbr.rel (0) target = $region33
  $region32: #{a_call__.3} parent=0 // pred_region
    %s695 = sadd.s32 0, 0
    %s696 = smul.u32 2, %s695
  $region33: #{a_call__.3} parent=0 // pred_fallthru
    _
  // Predicated region
  $region34: #{a_call__.3} parent=0 // pred_check
    _
  $region35: #{a_call__.3} parent=0 // pred_check_branch
    %698 = sbr.rel (0) target = $region37
  $region36: #{a_call__.3} parent=0 // pred_region
    _
  $region37: #{a_call__.3} parent=0 // pred_fallthru
    _
  // Predicated region
  $region38: #{a_call__.3} parent=0 // pred_check
    _
  $region39: #{a_call__.3} parent=0 // pred_check_branch
    %700 = sbr.rel (0) target = $region41
  $region40: #{a_call__.3} parent=0 // pred_region
    _
  $region41: #{a_call__.3} parent=0 // pred_fallthru
    _
  // Predicated region
  $region42: #{a_call__.3} parent=0 // pred_check
    _
  $region43: #{a_call__.3} parent=0 // pred_check_branch
    %702 = sbr.rel (0) target = $region45
  $region44: #{a_call__.3} parent=0 // pred_region
    %s703 = sadd.s32 0, 0
    %s704 = smul.u32 2, %s703
    %p705 = scmp.lt.s32.totalorder %s704, 1
    %s706 = scalar_select %p705, %s704, 1
    %s707 = smul.addr %s706, 8
    %s708 = scalar_lea.vmem %s5, %s707
  $region45: #{a_call__.3} parent=0 // pred_fallthru
    _
  // Predicated region
  $region46: #{a_call__.3} parent=0 // pred_check
    _
  $region47: #{a_call__.3} parent=0 // pred_check_branch
    %710 = sbr.rel (0) target = $region49
  $region48: #{a_call__.3} parent=0 // pred_region
    %s711 = sadd.s32 0, 0
    %s712 = smul.u32 2, %s711
    %p713 = scmp.lt.s32.totalorder %s712, 1
    %s714 = scalar_select %p713, %s712, 1
    %s715 = smul.addr %s714, 8
    %s716 = scalar_lea.vmem %s6, %s715
  $region49: #{a_call__.3} parent=0 // pred_fallthru
    _
  // Predicated region
  $region50: #{a_call__.3} parent=0 // pred_check
    _
  $region51: #{a_call__.3} parent=0 // pred_check_branch
    %718 = sbr.rel (0) target = $region53
  $region52: #{a_call__.3} parent=0 // pred_region
    _
  $region53: #{a_call__.3} parent=0 // pred_fallthru
    _
  // Predicated region
  $region54: #{a_call__.3} parent=0 // pred_check
    _
  $region55: #{a_call__.3} parent=0 // pred_check_branch
    %720 = sbr.rel (0) target = $region57
  $region56: #{a_call__.3} parent=0 // pred_region
    _
  $region57: #{a_call__.3} parent=0 // pred_fallthru
    _

</llo_original>
